<compile_context>
chip_gen: v6e
topology: v6e:2x2x1
jax: 0.10.0
libtpu: 0.0.40
codegen_flags: <defaults>
</compile_context>

<pallas_src>
import jax
import jax.numpy as jnp
from jax.experimental import pallas as pl
from jax.experimental.pallas import tpu as pltpu

EPS = 1e-5

# Flip to jnp.bfloat16 on v5e/v6e/v7x for MXU-native throughput (f32 accumulation
# is kept via preferred_element_type).  f32 here to guarantee the 1e-3 check.
MXU_DTYPE = jnp.float32


def _bn_relu_merged(acc, g_c, bt_c, sel, selT, m):
    """Train-mode BatchNorm + ReLU on a merged-lane (R, Wp*C) slab.

    acc : (R, Wp*C) f32 pre-activation, lane index = w*C + c
    g_c, bt_c : (1, C) BN gamma / beta
    sel : (Wp*C, C) one-hot lane->channel ; selT : (C, Wp*C)
    m   : pixels per channel (N*Hp*Wp)
    """
    inv_m = 1.0 / m
    rc = jnp.dot(acc, sel, preferred_element_type=jnp.float32)            # (R, C)
    rc2 = jnp.dot(acc * acc, sel, preferred_element_type=jnp.float32)     # (R, C)
    mean_c = jnp.sum(rc, axis=0, keepdims=True) * inv_m                   # (1, C)
    ex2_c = jnp.sum(rc2, axis=0, keepdims=True) * inv_m
    var_c = jnp.maximum(ex2_c - mean_c * mean_c, 0.0)
    scale_c = g_c * jax.lax.rsqrt(var_c + EPS)                            # rsqrt -> EUP
    shift_c = bt_c - mean_c * scale_c
    scale_lane = jnp.dot(scale_c, selT, preferred_element_type=jnp.float32)  # (1, Wp*C)
    shift_lane = jnp.dot(shift_c, selT, preferred_element_type=jnp.float32)
    return jnp.maximum(acc * scale_lane + shift_lane, 0.0)


def down_kernel(xr_ref, w1_ref, w2_ref, g1_ref, bt1_ref, g2_ref, bt2_ref,
                sel_ref, selT_ref, o_ref, pad_ref):
    # xr_ref : (N, Hp, 2, Wp, 2*Cin)  contiguous reshape of the NHWC input
    # w1_ref : (5, (Wp+4)*Cin,  Wp*Cout)  block-banded conv1 weights
    # w2_ref : (3, (Wp+2)*Cout, Wp*Cout)  block-banded conv2 weights
    # g*/bt* : (1, Cout) BN gamma / beta
    # sel    : (Wp*Cout, Cout) one-hot lane->channel ; selT : its transpose
    # o_ref  : (N*Hp, Wp*Cout) lane-dense output slab
    # pad_ref: (N, Hp+4, max((Wp+4)*Cin, (Wp+2)*Cout)) shared 'same'-halo scratch
    N, Hp, _, Wp, two_cin = xr_ref.shape
    Cin = two_cin // 2
    Lout = o_ref.shape[-1]
    Cout = Lout // Wp
    Lin1 = (Wp + 4) * Cin
    Lin2 = (Wp + 2) * Cout
    R = N * Hp
    M = N * Hp * Wp

    sel = sel_ref[...]
    selT = selT_ref[...]

    # ---- 2x2 max pool (all reduction in-kernel) ----
    xq = xr_ref[...]
    xh = jnp.maximum(xq[:, :, 0], xq[:, :, 1])            # H-pair max -> (N,Hp,Wp,2Cin)
    pooled = jnp.maximum(xh[..., :Cin], xh[..., Cin:])    # W-pair max -> (N,Hp,Wp,Cin)

    # ---- conv1 (5x5 'same') as 5 banded MXU matmuls over merged W*Cin lanes ----
    pad_ref[...] = jnp.zeros(pad_ref.shape, pad_ref.dtype)   # one unmasked halo clear
    # Interior store, one Wp-column block at a time (builds the merged layout
    # with plain masked stores, no trailing-dim reshape).
    # TODO(synk): when chaining these kernels the producer already emits the
    # merged (N*Hp, Wp*C) slab, so this per-column merge loop disappears.
    for j in range(Wp):
        pad_ref[:, 2:Hp + 2, (j + 2) * Cin:(j + 3) * Cin] = (
            pooled[:, :, j, :].astype(pad_ref.dtype))

    acc1 = jnp.zeros((R, Lout), jnp.float32)
    for kh in range(5):   # only 5 terms: short SSA chain, MXU pushes pipeline freely
        lhs = pad_ref[:, kh:kh + Hp, :Lin1].reshape(R, Lin1)
        acc1 = acc1 + jnp.dot(lhs, w1_ref[kh], preferred_element_type=jnp.float32)

    h1 = _bn_relu_merged(acc1, g1_ref[...], bt1_ref[...], sel, selT, M)

    # ---- conv2 (3x3 'same'); conv1's pad data is dead -> reuse the scratch ----
    pad_ref[...] = jnp.zeros(pad_ref.shape, pad_ref.dtype)
    pad_ref[:, 1:Hp + 1, Cout:Cout + Wp * Cout] = (
        h1.reshape(N, Hp, Lout).astype(pad_ref.dtype))        # leading-dim split only

    acc2 = jnp.zeros((R, Lout), jnp.float32)
    for kh in range(3):
        lhs = pad_ref[:, kh:kh + Hp, :Lin2].reshape(R, Lin2)
        acc2 = acc2 + jnp.dot(lhs, w2_ref[kh], preferred_element_type=jnp.float32)

    o_ref[...] = _bn_relu_merged(acc2, g2_ref[...], bt2_ref[...], sel, selT, M)


def _band_weights(w, Wp):
    """Fold k_w taps + channel contraction of an HWIO conv weight into a
    block-banded matrix per k_h row.

    w : (K, K, Cin, Cout) HWIO  ->  (K, (Wp+K-1)*Cin, Wp*Cout)
    big[kh, (j+kw)*Cin + ci, j*Cout + co] = w[kh, kw, ci, co]
    """
    K, _, Cin, Cout = w.shape
    wflat = w.reshape(K, K * Cin, Cout)
    cols = []
    for j in range(Wp):
        top = jnp.zeros((K, j * Cin, Cout), w.dtype)
        bot = jnp.zeros((K, (Wp - 1 - j) * Cin, Cout), w.dtype)
        cols.append(jnp.concatenate([top, wflat, bot], axis=1))
    return jnp.concatenate(cols, axis=2)


def down_forward(x_nchw, p):
    """Pallas implementation of Down.forward. x_nchw: (N, Cin, H, W) float32."""
    N, Cin, H, W = x_nchw.shape
    assert H % 2 == 0 and W % 2 == 0, "MaxPool2d(2) requires even H and W"
    Cout = p["w1"].shape[-1]
    Hp, Wp = H // 2, W // 2
    Lout = Wp * Cout
    Lin1 = (Wp + 4) * Cin
    Lin2 = (Wp + 2) * Cout

    # Layout glue to/from the PyTorch NCHW convention. In an NHWC end-to-end
    # pipeline (or when chaining these merged-lane kernels) both transposes
    # are dropped; the reshapes below are contiguous (free).
    x = jnp.transpose(x_nchw, (0, 2, 3, 1))                  # (N, H, W, Cin)
    xr = x.reshape(N, Hp, 2, Wp, 2 * Cin)                    # contiguous

    w1b = _band_weights(p["w1"], Wp).astype(MXU_DTYPE)       # (5, Lin1, Lout)
    w2b = _band_weights(p["w2"], Wp).astype(MXU_DTYPE)       # (3, Lin2, Lout)
    sel = jnp.tile(jnp.eye(Cout, dtype=jnp.float32), (Wp, 1))  # (Lout, Cout)
    selT = sel.T                                               # (Cout, Lout)

    out2d = pl.pallas_call(
        down_kernel,
        out_shape=jax.ShapeDtypeStruct((N * Hp, Lout), jnp.float32),
        in_specs=[pl.BlockSpec(memory_space=pltpu.MemorySpace.VMEM)] * 9,
        out_specs=pl.BlockSpec(memory_space=pltpu.MemorySpace.VMEM),
        scratch_shapes=[
            # single shared 'same'-halo buffer, reused by conv1 then conv2
            pltpu.VMEM((N, Hp + 4, max(Lin1, Lin2)), MXU_DTYPE),
        ],
        compiler_params=pltpu.CompilerParams(
            vmem_limit_bytes=32 * 1024 * 1024),   # >> actual footprint, <= physical everywhere
    )(xr, w1b, w2b, p["g1"], p["bt1"], p["g2"], p["bt2"], sel, selT)

    out = out2d.reshape(N, Hp, Wp, Cout)                     # contiguous
    return jnp.transpose(out, (0, 3, 1, 2))                  # back to NCHW


def down_reference(x_nchw, p):
    """Pure-JAX reference matching PyTorch Down.forward (train-mode BN, WITH biases)."""
    x = jnp.transpose(x_nchw, (0, 2, 3, 1))
    pooled = jax.lax.reduce_window(x, -jnp.inf, jax.lax.max,
                                   (1, 2, 2, 1), (1, 2, 2, 1), "VALID")

    def conv_bn_relu(h, w, b, g, bt):
        out = jax.lax.conv_general_dilated(
            h, w, (1, 1), "SAME",
            dimension_numbers=("NHWC", "HWIO", "NHWC")) + b
        mean = out.mean(axis=(0, 1, 2))
        var = ((out - mean) ** 2).mean(axis=(0, 1, 2))
        out = (out - mean) / jnp.sqrt(var + EPS) * g + bt
        return jnp.maximum(out, 0.0)

    h1 = conv_bn_relu(pooled, p["w1"], p["b1"], p["g1"], p["bt1"])
    h2 = conv_bn_relu(h1, p["w2"], p["b2"], p["g2"], p["bt2"])
    return jnp.transpose(h2, (0, 3, 1, 2))


if __name__ == "__main__":
    N, Cin, H, W = 2, 4, 16, 16
    Cout = 8

    key = jax.random.PRNGKey(0)
    ks = jax.random.split(key, 10)
    x = jax.random.normal(ks[0], (N, Cin, H, W), jnp.float32)

    params = {
        "w1": 0.1 * jax.random.normal(ks[1], (5, 5, Cin, Cout), jnp.float32),
        "b1": 0.1 * jax.random.normal(ks[2], (1, Cout), jnp.float32),
        "g1": 1.0 + 0.1 * jax.random.normal(ks[3], (1, Cout), jnp.float32),
        "bt1": 0.1 * jax.random.normal(ks[4], (1, Cout), jnp.float32),
        "w2": 0.1 * jax.random.normal(ks[5], (3, 3, Cout, Cout), jnp.float32),
        "b2": 0.1 * jax.random.normal(ks[6], (1, Cout), jnp.float32),
        "g2": 1.0 + 0.1 * jax.random.normal(ks[7], (1, Cout), jnp.float32),
        "bt2": 0.1 * jax.random.normal(ks[8], (1, Cout), jnp.float32),
    }

    out = down_forward(x, params)
    out = jax.block_until_ready(out)
    assert out.shape == (N, Cout, H // 2, W // 2), out.shape

    ref = down_reference(x, params)
    max_err = float(jnp.max(jnp.abs(out - ref)))
    if max_err > 1e-3:
        raise AssertionError(f"mismatch vs reference: max |err| = {max_err}")

    print("KERNEL_OK")
</pallas_src>

<mosaic_0001>
module attributes {stable_mosaic.version = 11 : i64} {
  func.func @down_kernel(%arg0: memref<2x8x2x8x8xf32, #tpu.memory_space<vmem>>, %arg1: memref<5x48x64xf32, #tpu.memory_space<vmem>>, %arg2: memref<3x80x64xf32, #tpu.memory_space<vmem>>, %arg3: memref<1x8xf32, #tpu.memory_space<vmem>>, %arg4: memref<1x8xf32, #tpu.memory_space<vmem>>, %arg5: memref<1x8xf32, #tpu.memory_space<vmem>>, %arg6: memref<1x8xf32, #tpu.memory_space<vmem>>, %arg7: memref<64x8xf32, #tpu.memory_space<vmem>>, %arg8: memref<8x64xf32, #tpu.memory_space<vmem>>, %arg9: memref<16x64xf32, #tpu.memory_space<vmem>>, %arg10: memref<2x12x80xf32, #tpu.memory_space<vmem>>) attributes {dimension_semantics = [], scalar_prefetch = 0 : i64, scratch_operands = 1 : i64, tpu.core_type = #tpu.core_type<tc>} {
    %c0 = arith.constant 0 : index
    %c0_0 = arith.constant 0 : index
    %0 = vector.load %arg7[%c0, %c0_0] : memref<64x8xf32, #tpu.memory_space<vmem>>, vector<64x8xf32>
    %c0_1 = arith.constant 0 : index
    %c0_2 = arith.constant 0 : index
    %1 = vector.load %arg8[%c0_1, %c0_2] : memref<8x64xf32, #tpu.memory_space<vmem>>, vector<8x64xf32>
    %c0_3 = arith.constant 0 : index
    %c0_4 = arith.constant 0 : index
    %c0_5 = arith.constant 0 : index
    %c0_6 = arith.constant 0 : index
    %c0_7 = arith.constant 0 : index
    %2 = vector.load %arg0[%c0_3, %c0_4, %c0_5, %c0_6, %c0_7] : memref<2x8x2x8x8xf32, #tpu.memory_space<vmem>>, vector<2x8x2x8x8xf32>
    %3 = vector.extract_strided_slice %2 {offsets = [0, 0, 0, 0, 0], sizes = [2, 8, 1, 8, 8], strides = [1, 1, 1, 1, 1]} : vector<2x8x2x8x8xf32> to vector<2x8x1x8x8xf32>
    %4 = vector.shape_cast %3 : vector<2x8x1x8x8xf32> to vector<2x8x8x8xf32>
    %5 = vector.extract_strided_slice %2 {offsets = [0, 0, 1, 0, 0], sizes = [2, 8, 1, 8, 8], strides = [1, 1, 1, 1, 1]} : vector<2x8x2x8x8xf32> to vector<2x8x1x8x8xf32>
    %6 = vector.shape_cast %5 : vector<2x8x1x8x8xf32> to vector<2x8x8x8xf32>
    %7 = arith.maximumf %4, %6 : vector<2x8x8x8xf32>
    %8 = vector.extract_strided_slice %7 {offsets = [0, 0, 0, 0], sizes = [2, 8, 8, 4], strides = [1, 1, 1, 1]} : vector<2x8x8x8xf32> to vector<2x8x8x4xf32>
    %9 = vector.extract_strided_slice %7 {offsets = [0, 0, 0, 4], sizes = [2, 8, 8, 4], strides = [1, 1, 1, 1]} : vector<2x8x8x8xf32> to vector<2x8x8x4xf32>
    %10 = arith.maximumf %8, %9 : vector<2x8x8x4xf32>
    %cst = arith.constant 0.000000e+00 : f32
    %11 = vector.broadcast %cst : f32 to vector<2x12x80xf32>
    %c0_8 = arith.constant 0 : index
    %c0_9 = arith.constant 0 : index
    %c0_10 = arith.constant 0 : index
    %12 = vector.load %arg10[%c0_8, %c0_9, %c0_10] : memref<2x12x80xf32, #tpu.memory_space<vmem>>, vector<2x12x80xf32>
    tpu.vector_store %arg10[%c0_8, %c0_9, %c0_10], %11 {strides = array<i32>} : memref<2x12x80xf32, #tpu.memory_space<vmem>>, vector<2x12x80xf32>,
    %13 = vector.extract_strided_slice %10 {offsets = [0, 0, 0, 0], sizes = [2, 8, 1, 4], strides = [1, 1, 1, 1]} : vector<2x8x8x4xf32> to vector<2x8x1x4xf32>
    %14 = vector.shape_cast %13 : vector<2x8x1x4xf32> to vector<2x8x4xf32>
    %c0_11 = arith.constant 0 : index
    %c2 = arith.constant 2 : index
    %c8 = arith.constant 8 : index
    %15 = vector.load %arg10[%c0_11, %c2, %c8] : memref<2x12x80xf32, #tpu.memory_space<vmem>>, vector<2x8x4xf32>
    tpu.vector_store %arg10[%c0_11, %c2, %c8], %14 {strides = array<i32>} : memref<2x12x80xf32, #tpu.memory_space<vmem>>, vector<2x8x4xf32>,
    %16 = vector.extract_strided_slice %10 {offsets = [0, 0, 1, 0], sizes = [2, 8, 1, 4], strides = [1, 1, 1, 1]} : vector<2x8x8x4xf32> to vector<2x8x1x4xf32>
    %17 = vector.shape_cast %16 : vector<2x8x1x4xf32> to vector<2x8x4xf32>
    %c0_12 = arith.constant 0 : index
    %c2_13 = arith.constant 2 : index
    %c12 = arith.constant 12 : index
    %18 = vector.load %arg10[%c0_12, %c2_13, %c12] : memref<2x12x80xf32, #tpu.memory_space<vmem>>, vector<2x8x4xf32>
    tpu.vector_store %arg10[%c0_12, %c2_13, %c12], %17 {strides = array<i32>} : memref<2x12x80xf32, #tpu.memory_space<vmem>>, vector<2x8x4xf32>,
    %19 = vector.extract_strided_slice %10 {offsets = [0, 0, 2, 0], sizes = [2, 8, 1, 4], strides = [1, 1, 1, 1]} : vector<2x8x8x4xf32> to vector<2x8x1x4xf32>
    %20 = vector.shape_cast %19 : vector<2x8x1x4xf32> to vector<2x8x4xf32>
    %c0_14 = arith.constant 0 : index
    %c2_15 = arith.constant 2 : index
    %c16 = arith.constant 16 : index
    %21 = vector.load %arg10[%c0_14, %c2_15, %c16] : memref<2x12x80xf32, #tpu.memory_space<vmem>>, vector<2x8x4xf32>
    tpu.vector_store %arg10[%c0_14, %c2_15, %c16], %20 {strides = array<i32>} : memref<2x12x80xf32, #tpu.memory_space<vmem>>, vector<2x8x4xf32>,
    %22 = vector.extract_strided_slice %10 {offsets = [0, 0, 3, 0], sizes = [2, 8, 1, 4], strides = [1, 1, 1, 1]} : vector<2x8x8x4xf32> to vector<2x8x1x4xf32>
    %23 = vector.shape_cast %22 : vector<2x8x1x4xf32> to vector<2x8x4xf32>
    %c0_16 = arith.constant 0 : index
    %c2_17 = arith.constant 2 : index
    %c20 = arith.constant 20 : index
    %24 = vector.load %arg10[%c0_16, %c2_17, %c20] : memref<2x12x80xf32, #tpu.memory_space<vmem>>, vector<2x8x4xf32>
    tpu.vector_store %arg10[%c0_16, %c2_17, %c20], %23 {strides = array<i32>} : memref<2x12x80xf32, #tpu.memory_space<vmem>>, vector<2x8x4xf32>,
    %25 = vector.extract_strided_slice %10 {offsets = [0, 0, 4, 0], sizes = [2, 8, 1, 4], strides = [1, 1, 1, 1]} : vector<2x8x8x4xf32> to vector<2x8x1x4xf32>
    %26 = vector.shape_cast %25 : vector<2x8x1x4xf32> to vector<2x8x4xf32>
    %c0_18 = arith.constant 0 : index
    %c2_19 = arith.constant 2 : index
    %c24 = arith.constant 24 : index
    %27 = vector.load %arg10[%c0_18, %c2_19, %c24] : memref<2x12x80xf32, #tpu.memory_space<vmem>>, vector<2x8x4xf32>
    tpu.vector_store %arg10[%c0_18, %c2_19, %c24], %26 {strides = array<i32>} : memref<2x12x80xf32, #tpu.memory_space<vmem>>, vector<2x8x4xf32>,
    %28 = vector.extract_strided_slice %10 {offsets = [0, 0, 5, 0], sizes = [2, 8, 1, 4], strides = [1, 1, 1, 1]} : vector<2x8x8x4xf32> to vector<2x8x1x4xf32>
    %29 = vector.shape_cast %28 : vector<2x8x1x4xf32> to vector<2x8x4xf32>
    %c0_20 = arith.constant 0 : index
    %c2_21 = arith.constant 2 : index
    %c28 = arith.constant 28 : index
    %30 = vector.load %arg10[%c0_20, %c2_21, %c28] : memref<2x12x80xf32, #tpu.memory_space<vmem>>, vector<2x8x4xf32>
    tpu.vector_store %arg10[%c0_20, %c2_21, %c28], %29 {strides = array<i32>} : memref<2x12x80xf32, #tpu.memory_space<vmem>>, vector<2x8x4xf32>,
    %31 = vector.extract_strided_slice %10 {offsets = [0, 0, 6, 0], sizes = [2, 8, 1, 4], strides = [1, 1, 1, 1]} : vector<2x8x8x4xf32> to vector<2x8x1x4xf32>
    %32 = vector.shape_cast %31 : vector<2x8x1x4xf32> to vector<2x8x4xf32>
    %c0_22 = arith.constant 0 : index
    %c2_23 = arith.constant 2 : index
    %c32 = arith.constant 32 : index
    %33 = vector.load %arg10[%c0_22, %c2_23, %c32] : memref<2x12x80xf32, #tpu.memory_space<vmem>>, vector<2x8x4xf32>
    tpu.vector_store %arg10[%c0_22, %c2_23, %c32], %32 {strides = array<i32>} : memref<2x12x80xf32, #tpu.memory_space<vmem>>, vector<2x8x4xf32>,
    %34 = vector.extract_strided_slice %10 {offsets = [0, 0, 7, 0], sizes = [2, 8, 1, 4], strides = [1, 1, 1, 1]} : vector<2x8x8x4xf32> to vector<2x8x1x4xf32>
    %35 = vector.shape_cast %34 : vector<2x8x1x4xf32> to vector<2x8x4xf32>
    %c0_24 = arith.constant 0 : index
    %c2_25 = arith.constant 2 : index
    %c36 = arith.constant 36 : index
    %36 = vector.load %arg10[%c0_24, %c2_25, %c36] : memref<2x12x80xf32, #tpu.memory_space<vmem>>, vector<2x8x4xf32>
    tpu.vector_store %arg10[%c0_24, %c2_25, %c36], %35 {strides = array<i32>} : memref<2x12x80xf32, #tpu.memory_space<vmem>>, vector<2x8x4xf32>,
    %cst_26 = arith.constant 0.000000e+00 : f32
    %37 = vector.broadcast %cst_26 : f32 to vector<16x64xf32>
    %c0_27 = arith.constant 0 : index
    %c0_28 = arith.constant 0 : index
    %c0_29 = arith.constant 0 : index
    %38 = vector.load %arg10[%c0_27, %c0_28, %c0_29] : memref<2x12x80xf32, #tpu.memory_space<vmem>>, vector<2x8x48xf32>
    %39 = vector.shape_cast %38 : vector<2x8x48xf32> to vector<16x48xf32>
    %c0_30 = arith.constant 0 : index
    %c0_31 = arith.constant 0 : index
    %c0_32 = arith.constant 0 : index
    %40 = vector.load %arg1[%c0_30, %c0_31, %c0_32] : memref<5x48x64xf32, #tpu.memory_space<vmem>>, vector<1x48x64xf32>
    %41 = vector.shape_cast %40 : vector<1x48x64xf32> to vector<48x64xf32>
    %cst_33 = arith.constant dense<0.000000e+00> : vector<16x64xf32>
    %42 = tpu.matmul %39, %41, %cst_33 {dimension_numbers = #tpu.dot_dimension_numbers<[1], [0], [0], [1], [0, 0, 1, 1], [], []>} : vector<16x48xf32>, vector<48x64xf32>, vector<16x64xf32> -> vector<16x64xf32>
    %43 = arith.addf %37, %42 : vector<16x64xf32>
    %c0_34 = arith.constant 0 : index
    %c1 = arith.constant 1 : index
    %c0_35 = arith.constant 0 : index
    %44 = vector.load %arg10[%c0_34, %c1, %c0_35] : memref<2x12x80xf32, #tpu.memory_space<vmem>>, vector<2x8x48xf32>
    %45 = vector.shape_cast %44 : vector<2x8x48xf32> to vector<16x48xf32>
    %c1_36 = arith.constant 1 : index
    %c0_37 = arith.constant 0 : index
    %c0_38 = arith.constant 0 : index
    %46 = vector.load %arg1[%c1_36, %c0_37, %c0_38] : memref<5x48x64xf32, #tpu.memory_space<vmem>>, vector<1x48x64xf32>
    %47 = vector.shape_cast %46 : vector<1x48x64xf32> to vector<48x64xf32>
    %cst_39 = arith.constant dense<0.000000e+00> : vector<16x64xf32>
    %48 = tpu.matmul %45, %47, %cst_39 {dimension_numbers = #tpu.dot_dimension_numbers<[1], [0], [0], [1], [0, 0, 1, 1], [], []>} : vector<16x48xf32>, vector<48x64xf32>, vector<16x64xf32> -> vector<16x64xf32>
    %49 = arith.addf %43, %48 : vector<16x64xf32>
    %c0_40 = arith.constant 0 : index
    %c2_41 = arith.constant 2 : index
    %c0_42 = arith.constant 0 : index
    %50 = vector.load %arg10[%c0_40, %c2_41, %c0_42] : memref<2x12x80xf32, #tpu.memory_space<vmem>>, vector<2x8x48xf32>
    %51 = vector.shape_cast %50 : vector<2x8x48xf32> to vector<16x48xf32>
    %c2_43 = arith.constant 2 : index
    %c0_44 = arith.constant 0 : index
    %c0_45 = arith.constant 0 : index
    %52 = vector.load %arg1[%c2_43, %c0_44, %c0_45] : memref<5x48x64xf32, #tpu.memory_space<vmem>>, vector<1x48x64xf32>
    %53 = vector.shape_cast %52 : vector<1x48x64xf32> to vector<48x64xf32>
    %cst_46 = arith.constant dense<0.000000e+00> : vector<16x64xf32>
    %54 = tpu.matmul %51, %53, %cst_46 {dimension_numbers = #tpu.dot_dimension_numbers<[1], [0], [0], [1], [0, 0, 1, 1], [], []>} : vector<16x48xf32>, vector<48x64xf32>, vector<16x64xf32> -> vector<16x64xf32>
    %55 = arith.addf %49, %54 : vector<16x64xf32>
    %c0_47 = arith.constant 0 : index
    %c3 = arith.constant 3 : index
    %c0_48 = arith.constant 0 : index
    %56 = vector.load %arg10[%c0_47, %c3, %c0_48] : memref<2x12x80xf32, #tpu.memory_space<vmem>>, vector<2x8x48xf32>
    %57 = vector.shape_cast %56 : vector<2x8x48xf32> to vector<16x48xf32>
    %c3_49 = arith.constant 3 : index
    %c0_50 = arith.constant 0 : index
    %c0_51 = arith.constant 0 : index
    %58 = vector.load %arg1[%c3_49, %c0_50, %c0_51] : memref<5x48x64xf32, #tpu.memory_space<vmem>>, vector<1x48x64xf32>
    %59 = vector.shape_cast %58 : vector<1x48x64xf32> to vector<48x64xf32>
    %cst_52 = arith.constant dense<0.000000e+00> : vector<16x64xf32>
    %60 = tpu.matmul %57, %59, %cst_52 {dimension_numbers = #tpu.dot_dimension_numbers<[1], [0], [0], [1], [0, 0, 1, 1], [], []>} : vector<16x48xf32>, vector<48x64xf32>, vector<16x64xf32> -> vector<16x64xf32>
    %61 = arith.addf %55, %60 : vector<16x64xf32>
    %c0_53 = arith.constant 0 : index
    %c4 = arith.constant 4 : index
    %c0_54 = arith.constant 0 : index
    %62 = vector.load %arg10[%c0_53, %c4, %c0_54] : memref<2x12x80xf32, #tpu.memory_space<vmem>>, vector<2x8x48xf32>
    %63 = vector.shape_cast %62 : vector<2x8x48xf32> to vector<16x48xf32>
    %c4_55 = arith.constant 4 : index
    %c0_56 = arith.constant 0 : index
    %c0_57 = arith.constant 0 : index
    %64 = vector.load %arg1[%c4_55, %c0_56, %c0_57] : memref<5x48x64xf32, #tpu.memory_space<vmem>>, vector<1x48x64xf32>
    %65 = vector.shape_cast %64 : vector<1x48x64xf32> to vector<48x64xf32>
    %cst_58 = arith.constant dense<0.000000e+00> : vector<16x64xf32>
    %66 = tpu.matmul %63, %65, %cst_58 {dimension_numbers = #tpu.dot_dimension_numbers<[1], [0], [0], [1], [0, 0, 1, 1], [], []>} : vector<16x48xf32>, vector<48x64xf32>, vector<16x64xf32> -> vector<16x64xf32>
    %67 = arith.addf %61, %66 : vector<16x64xf32>
    %c0_59 = arith.constant 0 : index
    %c0_60 = arith.constant 0 : index
    %68 = vector.load %arg3[%c0_59, %c0_60] : memref<1x8xf32, #tpu.memory_space<vmem>>, vector<1x8xf32>
    %c0_61 = arith.constant 0 : index
    %c0_62 = arith.constant 0 : index
    %69 = vector.load %arg4[%c0_61, %c0_62] : memref<1x8xf32, #tpu.memory_space<vmem>>, vector<1x8xf32>
    %cst_63 = arith.constant dense<0.000000e+00> : vector<16x8xf32>
    %70 = tpu.matmul %67, %0, %cst_63 {dimension_numbers = #tpu.dot_dimension_numbers<[1], [0], [0], [1], [0, 0, 1, 1], [], []>} : vector<16x64xf32>, vector<64x8xf32>, vector<16x8xf32> -> vector<16x8xf32>
    %71 = arith.mulf %67, %67 : vector<16x64xf32>
    %cst_64 = arith.constant dense<0.000000e+00> : vector<16x8xf32>
    %72 = tpu.matmul %71, %0, %cst_64 {dimension_numbers = #tpu.dot_dimension_numbers<[1], [0], [0], [1], [0, 0, 1, 1], [], []>} : vector<16x64xf32>, vector<64x8xf32>, vector<16x8xf32> -> vector<16x8xf32>
    %cst_65 = arith.constant dense<0.000000e+00> : vector<8xf32>
    %73 = vector.multi_reduction <add>, %70, %cst_65 [0] : vector<16x8xf32> to vector<8xf32>
    %74 = vector.shape_cast %73 : vector<8xf32> to vector<1x8xf32>
    %cst_66 = arith.constant 7.812500e-03 : f32
    %75 = vector.broadcast %cst_66 : f32 to vector<1x8xf32>
    %76 = arith.mulf %74, %75 : vector<1x8xf32>
    %cst_67 = arith.constant dense<0.000000e+00> : vector<8xf32>
    %77 = vector.multi_reduction <add>, %72, %cst_67 [0] : vector<16x8xf32> to vector<8xf32>
    %78 = vector.shape_cast %77 : vector<8xf32> to vector<1x8xf32>
    %cst_68 = arith.constant 7.812500e-03 : f32
    %79 = vector.broadcast %cst_68 : f32 to vector<1x8xf32>
    %80 = arith.mulf %78, %79 : vector<1x8xf32>
    %81 = arith.mulf %76, %76 : vector<1x8xf32>
    %82 = arith.subf %80, %81 : vector<1x8xf32>
    %cst_69 = arith.constant 0.000000e+00 : f32
    %83 = vector.broadcast %cst_69 : f32 to vector<1x8xf32>
    %84 = arith.maximumf %82, %83 : vector<1x8xf32>
    %cst_70 = arith.constant 9.99999974E-6 : f32
    %85 = vector.broadcast %cst_70 : f32 to vector<1x8xf32>
    %86 = arith.addf %84, %85 : vector<1x8xf32>
    %87 = math.rsqrt %86 : vector<1x8xf32>
    %88 = arith.mulf %68, %87 : vector<1x8xf32>
    %89 = arith.mulf %76, %88 : vector<1x8xf32>
    %90 = arith.subf %69, %89 : vector<1x8xf32>
    %cst_71 = arith.constant dense<0.000000e+00> : vector<1x64xf32>
    %91 = tpu.matmul %88, %1, %cst_71 {dimension_numbers = #tpu.dot_dimension_numbers<[1], [0], [0], [1], [0, 0, 1, 1], [], []>} : vector<1x8xf32>, vector<8x64xf32>, vector<1x64xf32> -> vector<1x64xf32>
    %cst_72 = arith.constant dense<0.000000e+00> : vector<1x64xf32>
    %92 = tpu.matmul %90, %1, %cst_72 {dimension_numbers = #tpu.dot_dimension_numbers<[1], [0], [0], [1], [0, 0, 1, 1], [], []>} : vector<1x8xf32>, vector<8x64xf32>, vector<1x64xf32> -> vector<1x64xf32>
    %93 = vector.broadcast %91 : vector<1x64xf32> to vector<16x64xf32>
    %94 = arith.mulf %67, %93 : vector<16x64xf32>
    %95 = vector.broadcast %92 : vector<1x64xf32> to vector<16x64xf32>
    %96 = arith.addf %94, %95 : vector<16x64xf32>
    %cst_73 = arith.constant 0.000000e+00 : f32
    %97 = vector.broadcast %cst_73 : f32 to vector<16x64xf32>
    %98 = arith.maximumf %96, %97 : vector<16x64xf32>
    %cst_74 = arith.constant 0.000000e+00 : f32
    %99 = vector.broadcast %cst_74 : f32 to vector<2x12x80xf32>
    %c0_75 = arith.constant 0 : index
    %c0_76 = arith.constant 0 : index
    %c0_77 = arith.constant 0 : index
    %100 = vector.load %arg10[%c0_75, %c0_76, %c0_77] : memref<2x12x80xf32, #tpu.memory_space<vmem>>, vector<2x12x80xf32>
    tpu.vector_store %arg10[%c0_75, %c0_76, %c0_77], %99 {strides = array<i32>} : memref<2x12x80xf32, #tpu.memory_space<vmem>>, vector<2x12x80xf32>,
    %101 = vector.shape_cast %98 : vector<16x64xf32> to vector<2x8x64xf32>
    %c0_78 = arith.constant 0 : index
    %c1_79 = arith.constant 1 : index
    %c8_80 = arith.constant 8 : index
    %102 = vector.load %arg10[%c0_78, %c1_79, %c8_80] : memref<2x12x80xf32, #tpu.memory_space<vmem>>, vector<2x8x64xf32>
    tpu.vector_store %arg10[%c0_78, %c1_79, %c8_80], %101 {strides = array<i32>} : memref<2x12x80xf32, #tpu.memory_space<vmem>>, vector<2x8x64xf32>,
    %cst_81 = arith.constant 0.000000e+00 : f32
    %103 = vector.broadcast %cst_81 : f32 to vector<16x64xf32>
    %c0_82 = arith.constant 0 : index
    %c0_83 = arith.constant 0 : index
    %c0_84 = arith.constant 0 : index
    %104 = vector.load %arg10[%c0_82, %c0_83, %c0_84] : memref<2x12x80xf32, #tpu.memory_space<vmem>>, vector<2x8x80xf32>
    %105 = vector.shape_cast %104 : vector<2x8x80xf32> to vector<16x80xf32>
    %c0_85 = arith.constant 0 : index
    %c0_86 = arith.constant 0 : index
    %c0_87 = arith.constant 0 : index
    %106 = vector.load %arg2[%c0_85, %c0_86, %c0_87] : memref<3x80x64xf32, #tpu.memory_space<vmem>>, vector<1x80x64xf32>
    %107 = vector.shape_cast %106 : vector<1x80x64xf32> to vector<80x64xf32>
    %cst_88 = arith.constant dense<0.000000e+00> : vector<16x64xf32>
    %108 = tpu.matmul %105, %107, %cst_88 {dimension_numbers = #tpu.dot_dimension_numbers<[1], [0], [0], [1], [0, 0, 1, 1], [], []>} : vector<16x80xf32>, vector<80x64xf32>, vector<16x64xf32> -> vector<16x64xf32>
    %109 = arith.addf %103, %108 : vector<16x64xf32>
    %c0_89 = arith.constant 0 : index
    %c1_90 = arith.constant 1 : index
    %c0_91 = arith.constant 0 : index
    %110 = vector.load %arg10[%c0_89, %c1_90, %c0_91] : memref<2x12x80xf32, #tpu.memory_space<vmem>>, vector<2x8x80xf32>
    %111 = vector.shape_cast %110 : vector<2x8x80xf32> to vector<16x80xf32>
    %c1_92 = arith.constant 1 : index
    %c0_93 = arith.constant 0 : index
    %c0_94 = arith.constant 0 : index
    %112 = vector.load %arg2[%c1_92, %c0_93, %c0_94] : memref<3x80x64xf32, #tpu.memory_space<vmem>>, vector<1x80x64xf32>
    %113 = vector.shape_cast %112 : vector<1x80x64xf32> to vector<80x64xf32>
    %cst_95 = arith.constant dense<0.000000e+00> : vector<16x64xf32>
    %114 = tpu.matmul %111, %113, %cst_95 {dimension_numbers = #tpu.dot_dimension_numbers<[1], [0], [0], [1], [0, 0, 1, 1], [], []>} : vector<16x80xf32>, vector<80x64xf32>, vector<16x64xf32> -> vector<16x64xf32>
    %115 = arith.addf %109, %114 : vector<16x64xf32>
    %c0_96 = arith.constant 0 : index
    %c2_97 = arith.constant 2 : index
    %c0_98 = arith.constant 0 : index
    %116 = vector.load %arg10[%c0_96, %c2_97, %c0_98] : memref<2x12x80xf32, #tpu.memory_space<vmem>>, vector<2x8x80xf32>
    %117 = vector.shape_cast %116 : vector<2x8x80xf32> to vector<16x80xf32>
    %c2_99 = arith.constant 2 : index
    %c0_100 = arith.constant 0 : index
    %c0_101 = arith.constant 0 : index
    %118 = vector.load %arg2[%c2_99, %c0_100, %c0_101] : memref<3x80x64xf32, #tpu.memory_space<vmem>>, vector<1x80x64xf32>
    %119 = vector.shape_cast %118 : vector<1x80x64xf32> to vector<80x64xf32>
    %cst_102 = arith.constant dense<0.000000e+00> : vector<16x64xf32>
    %120 = tpu.matmul %117, %119, %cst_102 {dimension_numbers = #tpu.dot_dimension_numbers<[1], [0], [0], [1], [0, 0, 1, 1], [], []>} : vector<16x80xf32>, vector<80x64xf32>, vector<16x64xf32> -> vector<16x64xf32>
    %121 = arith.addf %115, %120 : vector<16x64xf32>
    %c0_103 = arith.constant 0 : index
    %c0_104 = arith.constant 0 : index
    %122 = vector.load %arg5[%c0_103, %c0_104] : memref<1x8xf32, #tpu.memory_space<vmem>>, vector<1x8xf32>
    %c0_105 = arith.constant 0 : index
    %c0_106 = arith.constant 0 : index
    %123 = vector.load %arg6[%c0_105, %c0_106] : memref<1x8xf32, #tpu.memory_space<vmem>>, vector<1x8xf32>
    %cst_107 = arith.constant dense<0.000000e+00> : vector<16x8xf32>
    %124 = tpu.matmul %121, %0, %cst_107 {dimension_numbers = #tpu.dot_dimension_numbers<[1], [0], [0], [1], [0, 0, 1, 1], [], []>} : vector<16x64xf32>, vector<64x8xf32>, vector<16x8xf32> -> vector<16x8xf32>
    %125 = arith.mulf %121, %121 : vector<16x64xf32>
    %cst_108 = arith.constant dense<0.000000e+00> : vector<16x8xf32>
    %126 = tpu.matmul %125, %0, %cst_108 {dimension_numbers = #tpu.dot_dimension_numbers<[1], [0], [0], [1], [0, 0, 1, 1], [], []>} : vector<16x64xf32>, vector<64x8xf32>, vector<16x8xf32> -> vector<16x8xf32>
    %cst_109 = arith.constant dense<0.000000e+00> : vector<8xf32>
    %127 = vector.multi_reduction <add>, %124, %cst_109 [0] : vector<16x8xf32> to vector<8xf32>
    %128 = vector.shape_cast %127 : vector<8xf32> to vector<1x8xf32>
    %cst_110 = arith.constant 7.812500e-03 : f32
    %129 = vector.broadcast %cst_110 : f32 to vector<1x8xf32>
    %130 = arith.mulf %128, %129 : vector<1x8xf32>
    %cst_111 = arith.constant dense<0.000000e+00> : vector<8xf32>
    %131 = vector.multi_reduction <add>, %126, %cst_111 [0] : vector<16x8xf32> to vector<8xf32>
    %132 = vector.shape_cast %131 : vector<8xf32> to vector<1x8xf32>
    %cst_112 = arith.constant 7.812500e-03 : f32
    %133 = vector.broadcast %cst_112 : f32 to vector<1x8xf32>
    %134 = arith.mulf %132, %133 : vector<1x8xf32>
    %135 = arith.mulf %130, %130 : vector<1x8xf32>
    %136 = arith.subf %134, %135 : vector<1x8xf32>
    %cst_113 = arith.constant 0.000000e+00 : f32
    %137 = vector.broadcast %cst_113 : f32 to vector<1x8xf32>
    %138 = arith.maximumf %136, %137 : vector<1x8xf32>
    %cst_114 = arith.constant 9.99999974E-6 : f32
    %139 = vector.broadcast %cst_114 : f32 to vector<1x8xf32>
    %140 = arith.addf %138, %139 : vector<1x8xf32>
    %141 = math.rsqrt %140 : vector<1x8xf32>
    %142 = arith.mulf %122, %141 : vector<1x8xf32>
    %143 = arith.mulf %130, %142 : vector<1x8xf32>
    %144 = arith.subf %123, %143 : vector<1x8xf32>
    %cst_115 = arith.constant dense<0.000000e+00> : vector<1x64xf32>
    %145 = tpu.matmul %142, %1, %cst_115 {dimension_numbers = #tpu.dot_dimension_numbers<[1], [0], [0], [1], [0, 0, 1, 1], [], []>} : vector<1x8xf32>, vector<8x64xf32>, vector<1x64xf32> -> vector<1x64xf32>
    %cst_116 = arith.constant dense<0.000000e+00> : vector<1x64xf32>
    %146 = tpu.matmul %144, %1, %cst_116 {dimension_numbers = #tpu.dot_dimension_numbers<[1], [0], [0], [1], [0, 0, 1, 1], [], []>} : vector<1x8xf32>, vector<8x64xf32>, vector<1x64xf32> -> vector<1x64xf32>
    %147 = vector.broadcast %145 : vector<1x64xf32> to vector<16x64xf32>
    %148 = arith.mulf %121, %147 : vector<16x64xf32>
    %149 = vector.broadcast %146 : vector<1x64xf32> to vector<16x64xf32>
    %150 = arith.addf %148, %149 : vector<16x64xf32>
    %cst_117 = arith.constant 0.000000e+00 : f32
    %151 = vector.broadcast %cst_117 : f32 to vector<16x64xf32>
    %152 = arith.maximumf %150, %151 : vector<16x64xf32>
    %c0_118 = arith.constant 0 : index
    %c0_119 = arith.constant 0 : index
    %153 = vector.load %arg9[%c0_118, %c0_119] : memref<16x64xf32, #tpu.memory_space<vmem>>, vector<16x64xf32>
    tpu.vector_store %arg9[%c0_118, %c0_119], %152 {strides = array<i32>} : memref<16x64xf32, #tpu.memory_space<vmem>>, vector<16x64xf32>,
    return
  }
}

</mosaic_0001>

<llo_original>
// kernel: tpu_custom_call.1
$region0: #{tpu_custom_call.1}
  #allocation0 [shape = 'u32[]', space=smem, size = 0x4, offset = 0x4, fixed_abs, tag = 'smem constant byte address 0x4 - core index']
  #allocation1 [shape = 'u32[144,128]{1,0:T(1,128)}', space=vmem, size = 0x12000, scoped, tag = 'internal scratch']
  #allocation2 [shape = 'f32[2,12,80]{2,1,0:T(8,128)}', space=vmem, size = 0x4000, scoped, tag = 'scratch operand']
  %s0 = inlined_call_operand.vmem [shape: f32[2,8,2,8,8], index: 0, kind: input, shape index: {}]
  %s1 = inlined_call_operand.vmem [shape: f32[5,48,64], index: 1, kind: input, shape index: {}]
  %s2 = inlined_call_operand.vmem [shape: f32[3,80,64], index: 2, kind: input, shape index: {}]
  %s3 = inlined_call_operand.vmem [shape: f32[1,8], index: 3, kind: input, shape index: {}]
  %s4 = inlined_call_operand.vmem [shape: f32[1,8], index: 4, kind: input, shape index: {}]
  %s5 = inlined_call_operand.vmem [shape: f32[1,8], index: 5, kind: input, shape index: {}]
  %s6 = inlined_call_operand.vmem [shape: f32[1,8], index: 6, kind: input, shape index: {}]
  %s7 = inlined_call_operand.vmem [shape: f32[64,8], index: 7, kind: input, shape index: {}]
  %s8 = inlined_call_operand.vmem [shape: f32[8,64], index: 8, kind: input, shape index: {}]
  %s9 = inlined_call_operand.hbm [shape: f32[16,64], index: 9, kind: output, shape index: {}]
  %s10 = sld [smem:[#allocation0]]
  $region46: #{tpu_custom_call.1} parent=0
    _
  %s12 = ssub.s32 1, %s10
  %s13 = scalar_select 0, %s12, %s10
  $region1: #{tpu_custom_call.1} parent=0
    #allocation3 [shape = 'u8[8192]{0}', space=vmem, size = 0x2000, scoped, tag = 'output window, operand 0, single buffered']
    #allocation4 [shape = 's32[1]{0}', space=sflag, size = 0x4, scoped, tag = 'scoped memory for tpu_custom_call.1']
    %14 = vsyncpa [#allocation4], 0
    // Predicated region
    $region2: #{tpu_custom_call.1} parent=1 // pred_check
      _
    $region3: #{tpu_custom_call.1} parent=1 // pred_check_branch
      %16 = sbr.rel (0) target = $region5
    $region4: #{tpu_custom_call.1} parent=1 // pred_region
      _
    $region5: #{tpu_custom_call.1} parent=1 // pred_fallthru
      _
    // Predicated region
    $region6: #{tpu_custom_call.1} parent=1 // pred_check
      _
    $region7: #{tpu_custom_call.1} parent=1 // pred_check_branch
      %18 = sbr.rel (0) target = $region9
    $region8: #{tpu_custom_call.1} parent=1 // pred_region
      _
    $region9: #{tpu_custom_call.1} parent=1 // pred_fallthru
      _
    // Predicated region
    $region10: #{tpu_custom_call.1} parent=1 // pred_check
      _
    $region11: #{tpu_custom_call.1} parent=1 // pred_check_branch
      %20 = sbr.rel (0) target = $region13
    $region12: #{tpu_custom_call.1} parent=1 // pred_region
      _
    $region13: #{tpu_custom_call.1} parent=1 // pred_fallthru
      _
    // Predicated region
    $region14: #{tpu_custom_call.1} parent=1 // pred_check
      _
    $region15: #{tpu_custom_call.1} parent=1 // pred_check_branch
      %22 = sbr.rel (0) target = $region17
    $region16: #{tpu_custom_call.1} parent=1 // pred_region
      _
    $region17: #{tpu_custom_call.1} parent=1 // pred_fallthru
      _
    // Predicated region
    $region18: #{tpu_custom_call.1} parent=1 // pred_check
      _
    $region19: #{tpu_custom_call.1} parent=1 // pred_check_branch
      %24 = sbr.rel (0) target = $region21
    $region20: #{tpu_custom_call.1} parent=1 // pred_region
      _
    $region21: #{tpu_custom_call.1} parent=1 // pred_fallthru
      _
    // Predicated region
    $region22: #{tpu_custom_call.1} parent=1 // pred_check
      _
    $region23: #{tpu_custom_call.1} parent=1 // pred_check_branch
      %26 = sbr.rel (0) target = $region25
    $region24: #{tpu_custom_call.1} parent=1 // pred_region
      _
    $region25: #{tpu_custom_call.1} parent=1 // pred_fallthru
      _
    // Predicated region
    $region26: #{tpu_custom_call.1} parent=1 // pred_check
      _
    $region27: #{tpu_custom_call.1} parent=1 // pred_check_branch
      %28 = sbr.rel (0) target = $region29
    $region28: #{tpu_custom_call.1} parent=1 // pred_region
      _
    $region29: #{tpu_custom_call.1} parent=1 // pred_fallthru
      _
    // Predicated region
    $region30: #{tpu_custom_call.1} parent=1 // pred_check
      _
    $region31: #{tpu_custom_call.1} parent=1 // pred_check_branch
      %30 = sbr.rel (0) target = $region33
    $region32: #{tpu_custom_call.1} parent=1 // pred_region
      _
    $region33: #{tpu_custom_call.1} parent=1 // pred_fallthru
      _
    // Predicated region
    $region34: #{tpu_custom_call.1} parent=1 // pred_check
      _
    $region35: #{tpu_custom_call.1} parent=1 // pred_check_branch
      %32 = sbr.rel (0) target = $region37
    $region36: #{tpu_custom_call.1} parent=1 // pred_region
      _
    $region37: #{tpu_custom_call.1} parent=1 // pred_fallthru
      _
    %v33 = vld [vmem:[%s7] sm:$0xff]
    %v34 = vld [vmem:[%s7 + $0x8] sm:$0xff]
    %v35 = vld [vmem:[%s7 + $0x10] sm:$0xff]
    %v36 = vld [vmem:[%s7 + $0x18] sm:$0xff]
    %v37 = vld [vmem:[%s7 + $0x20] sm:$0xff]
    %v38 = vld [vmem:[%s7 + $0x28] sm:$0xff]
    %v39 = vld [vmem:[%s7 + $0x30] sm:$0xff]
    %v40 = vld [vmem:[%s7 + $0x38] sm:$0xff]
    %v41 = vld [vmem:[%s8] sm:$0xff]
    %v42 = vld [vmem:[%s0] sm:$0xff]
    %v43 = vld [vmem:[%s0 + $0x8] sm:$0xff]
    %v44 = vld [vmem:[%s0 + $0x10] sm:$0xff]
    %v45 = vld [vmem:[%s0 + $0x18] sm:$0xff]
    %v46 = vld [vmem:[%s0 + $0x20] sm:$0xff]
    %v47 = vld [vmem:[%s0 + $0x28] sm:$0xff]
    %v48 = vld [vmem:[%s0 + $0x30] sm:$0xff]
    %v49 = vld [vmem:[%s0 + $0x38] sm:$0xff]
    %v50 = vld [vmem:[%s0 + $0x40] sm:$0xff]
    %v51 = vld [vmem:[%s0 + $0x48] sm:$0xff]
    %v52 = vld [vmem:[%s0 + $0x50] sm:$0xff]
    %v53 = vld [vmem:[%s0 + $0x58] sm:$0xff]
    %v54 = vld [vmem:[%s0 + $0x60] sm:$0xff]
    %v55 = vld [vmem:[%s0 + $0x68] sm:$0xff]
    %v56 = vld [vmem:[%s0 + $0x70] sm:$0xff]
    %v57 = vld [vmem:[%s0 + $0x78] sm:$0xff]
    %v58 = vld [vmem:[%s0 + $0x80] sm:$0xff]
    %v59 = vld [vmem:[%s0 + $0x88] sm:$0xff]
    %v60 = vld [vmem:[%s0 + $0x90] sm:$0xff]
    %v61 = vld [vmem:[%s0 + $0x98] sm:$0xff]
    %v62 = vld [vmem:[%s0 + $0xa0] sm:$0xff]
    %v63 = vld [vmem:[%s0 + $0xa8] sm:$0xff]
    %v64 = vld [vmem:[%s0 + $0xb0] sm:$0xff]
    %v65 = vld [vmem:[%s0 + $0xb8] sm:$0xff]
    %v66 = vld [vmem:[%s0 + $0xc0] sm:$0xff]
    %v67 = vld [vmem:[%s0 + $0xc8] sm:$0xff]
    %v68 = vld [vmem:[%s0 + $0xd0] sm:$0xff]
    %v69 = vld [vmem:[%s0 + $0xd8] sm:$0xff]
    %v70 = vld [vmem:[%s0 + $0xe0] sm:$0xff]
    %v71 = vld [vmem:[%s0 + $0xe8] sm:$0xff]
    %v72 = vld [vmem:[%s0 + $0xf0] sm:$0xff]
    %v73 = vld [vmem:[%s0 + $0xf8] sm:$0xff]
    %v74 = vmax.f32 %v42, %v43
    %v75 = vmax.f32 %v44, %v45
    %v76 = vmax.f32 %v46, %v47
    %v77 = vmax.f32 %v48, %v49
    %v78 = vmax.f32 %v50, %v51
    %v79 = vmax.f32 %v52, %v53
    %v80 = vmax.f32 %v54, %v55
    %v81 = vmax.f32 %v56, %v57
    %v82 = vmax.f32 %v58, %v59
    %v83 = vmax.f32 %v60, %v61
    %v84 = vmax.f32 %v62, %v63
    %v85 = vmax.f32 %v64, %v65
    %v86 = vmax.f32 %v66, %v67
    %v87 = vmax.f32 %v68, %v69
    %v88 = vmax.f32 %v70, %v71
    %v89 = vmax.f32 %v72, %v73
    %106 = vrot.lane.b32.xlu0 %v74, 124
    %v107 = vpop.permute.xlu0 %106
    %108 = vrot.lane.b32.xlu0 %v75, 124
    %v109 = vpop.permute.xlu0 %108
    %110 = vrot.lane.b32.xlu0 %v76, 124
    %v111 = vpop.permute.xlu0 %110
    %112 = vrot.lane.b32.xlu0 %v77, 124
    %v113 = vpop.permute.xlu0 %112
    %114 = vrot.lane.b32.xlu0 %v78, 124
    %v115 = vpop.permute.xlu0 %114
    %116 = vrot.lane.b32.xlu0 %v79, 124
    %v117 = vpop.permute.xlu0 %116
    %118 = vrot.lane.b32.xlu0 %v80, 124
    %v119 = vpop.permute.xlu0 %118
    %120 = vrot.lane.b32.xlu0 %v81, 124
    %v121 = vpop.permute.xlu0 %120
    %122 = vrot.lane.b32.xlu0 %v82, 124
    %v123 = vpop.permute.xlu0 %122
    %124 = vrot.lane.b32.xlu0 %v83, 124
    %v125 = vpop.permute.xlu0 %124
    %126 = vrot.lane.b32.xlu0 %v84, 124
    %v127 = vpop.permute.xlu0 %126
    %128 = vrot.lane.b32.xlu0 %v85, 124
    %v129 = vpop.permute.xlu0 %128
    %130 = vrot.lane.b32.xlu0 %v86, 124
    %v131 = vpop.permute.xlu0 %130
    %132 = vrot.lane.b32.xlu0 %v87, 124
    %v133 = vpop.permute.xlu0 %132
    %134 = vrot.lane.b32.xlu0 %v88, 124
    %v135 = vpop.permute.xlu0 %134
    %136 = vrot.lane.b32.xlu0 %v89, 124
    %v137 = vpop.permute.xlu0 %136
    %v154 = vmax.f32 %v74, %v107
    %v155 = vmax.f32 %v75, %v109
    %v156 = vmax.f32 %v76, %v111
    %v157 = vmax.f32 %v77, %v113
    %v158 = vmax.f32 %v78, %v115
    %v159 = vmax.f32 %v79, %v117
    %v160 = vmax.f32 %v80, %v119
    %v161 = vmax.f32 %v81, %v121
    %v162 = vmax.f32 %v82, %v123
    %v163 = vmax.f32 %v83, %v125
    %v164 = vmax.f32 %v84, %v127
    %v165 = vmax.f32 %v85, %v129
    %v166 = vmax.f32 %v86, %v131
    %v167 = vmax.f32 %v87, %v133
    %v168 = vmax.f32 %v88, %v135
    %v169 = vmax.f32 %v89, %v137
    %vm170 = vcmask 654336
    %171 = vst.msk [vmem:[#allocation2] sm:$0xff] %vm170, 0.0
    %vm172 = vcmask 650240
    %173 = vst.msk [vmem:[#allocation2 + $0x8] sm:$0xf] %vm172, 0.0
    %174 = vst.msk [vmem:[#allocation2 + $0x10] sm:$0xff] %vm170, 0.0
    %175 = vst.msk [vmem:[#allocation2 + $0x18] sm:$0xf] %vm172, 0.0
    %v192 = vrot.slane %v155, 7
    %vm193 = vcmask 1041409
    %v194 = vsel %vm193, %v192, %v154
    %v195 = vrot.slane %v156, 6
    %vm196 = vcmask 1042434
    %v197 = vsel %vm196, %v195, %v194
    %v198 = vrot.slane %v157, 5
    %vm199 = vcmask 1043459
    %v200 = vsel %vm199, %v198, %v197
    %v201 = vrot.slane %v158, 4
    %vm202 = vcmask 1044484
    %v203 = vsel %vm202, %v201, %v200
    %v204 = vrot.slane %v159, 3
    %vm205 = vcmask 1045509
    %v206 = vsel %vm205, %v204, %v203
    %v207 = vrot.slane %v160, 2
    %vm208 = vcmask 1046534
    %v209 = vsel %vm208, %v207, %v206
    %v210 = vrot.slane %v161, 1
    %vm211 = vcmask 1047559
    %v212 = vsel %vm211, %v210, %v209
    %v213 = vrot.slane %v163, 7
    %v214 = vsel %vm193, %v213, %v162
    %v215 = vrot.slane %v164, 6
    %v216 = vsel %vm196, %v215, %v214
    %v217 = vrot.slane %v165, 5
    %v218 = vsel %vm199, %v217, %v216
    %v219 = vrot.slane %v166, 4
    %v220 = vsel %vm202, %v219, %v218
    %v221 = vrot.slane %v167, 3
    %v222 = vsel %vm205, %v221, %v220
    %v223 = vrot.slane %v168, 2
    %v224 = vsel %vm208, %v223, %v222
    %v225 = vrot.slane %v169, 1
    %v226 = vsel %vm211, %v225, %v224
    %227 = vrot.lane.b32.xlu0 %v212, 8
    %v228 = vpop.permute.xlu0 %227
    %229 = vrot.lane.b32.xlu0 %v226, 8
    %v230 = vpop.permute.xlu0 %229
    %vm233 = vcmask 97344
    %234 = vst.msk [vmem:[#allocation2 + $0x2] sm:$0xff] %vm233, %v228
    %235 = vst.msk [vmem:[#allocation2 + $0x12] sm:$0xff] %vm233, %v230
    %v236 = vsel %vm196, %v192, %v154
    %v237 = vsel %vm199, %v195, %v236
    %v238 = vsel %vm202, %v198, %v237
    %v239 = vsel %vm205, %v201, %v238
    %v240 = vsel %vm208, %v204, %v239
    %v241 = vsel %vm211, %v207, %v240
    %v242 = vsel %vm196, %v213, %v162
    %v243 = vsel %vm199, %v215, %v242
    %v244 = vsel %vm202, %v217, %v243
    %v245 = vsel %vm205, %v219, %v244
    %v246 = vsel %vm208, %v221, %v245
    %v247 = vsel %vm211, %v223, %v246
    %248 = vrot.lane.b32.xlu0 %v241, 12
    %v249 = vpop.permute.xlu0 %248
    %250 = vrot.lane.b32.xlu0 %v210, 12
    %v251 = vpop.permute.xlu0 %250
    %252 = vrot.lane.b32.xlu0 %v247, 12
    %v253 = vpop.permute.xlu0 %252
    %254 = vrot.lane.b32.xlu0 %v225, 12
    %v255 = vpop.permute.xlu0 %254
    %vm260 = vcmask 130145
    %261 = vst.msk [vmem:[#allocation2 + $0x1] sm:$0xfe] %vm260, %v249
    %vm262 = vcmask 122976
    %263 = vst.msk [vmem:[#allocation2 + $0x9] sm:$0x1] %vm262, %v251
    %264 = vst.msk [vmem:[#allocation2 + $0x11] sm:$0xfe] %vm260, %v253
    %265 = vst.msk [vmem:[#allocation2 + $0x19] sm:$0x1] %vm262, %v255
    %v266 = vsel %vm199, %v192, %v154
    %v267 = vsel %vm202, %v195, %v266
    %v268 = vsel %vm205, %v198, %v267
    %v269 = vsel %vm208, %v201, %v268
    %v270 = vsel %vm211, %v204, %v269
    %v271 = vsel %vm193, %v210, %v207
    %v272 = vsel %vm199, %v213, %v162
    %v273 = vsel %vm202, %v215, %v272
    %v274 = vsel %vm205, %v217, %v273
    %v275 = vsel %vm208, %v219, %v274
    %v276 = vsel %vm211, %v221, %v275
    %v277 = vsel %vm193, %v225, %v223
    %278 = vrot.lane.b32.xlu0 %v270, 16
    %v279 = vpop.permute.xlu0 %278
    %280 = vrot.lane.b32.xlu0 %v271, 16
    %v281 = vpop.permute.xlu0 %280
    %282 = vrot.lane.b32.xlu0 %v276, 16
    %v283 = vpop.permute.xlu0 %282
    %284 = vrot.lane.b32.xlu0 %v277, 16
    %v285 = vpop.permute.xlu0 %284
    %vm290 = vcmask 162946
    %291 = vst.msk [vmem:[#allocation2] sm:$0xfc] %vm290, %v279
    %vm292 = vcmask 156800
    %293 = vst.msk [vmem:[#allocation2 + $0x8] sm:$0x3] %vm292, %v281
    %294 = vst.msk [vmem:[#allocation2 + $0x10] sm:$0xfc] %vm290, %v283
    %295 = vst.msk [vmem:[#allocation2 + $0x18] sm:$0x3] %vm292, %v285
    %v296 = vsel %vm202, %v192, %v154
    %v297 = vsel %vm205, %v195, %v296
    %v298 = vsel %vm208, %v198, %v297
    %v299 = vsel %vm211, %v201, %v298
    %v300 = vsel %vm193, %v207, %v204
    %v301 = vsel %vm196, %v210, %v300
    %v302 = vsel %vm202, %v213, %v162
    %v303 = vsel %vm205, %v215, %v302
    %v304 = vsel %vm208, %v217, %v303
    %v305 = vsel %vm211, %v219, %v304
    %v306 = vsel %vm193, %v223, %v221
    %v307 = vsel %vm196, %v225, %v306
    %308 = vrot.lane.b32.xlu0 %v299, 20
    %v309 = vpop.permute.xlu0 %308
    %310 = vrot.lane.b32.xlu0 %v301, 20
    %v311 = vpop.permute.xlu0 %310
    %312 = vrot.lane.b32.xlu0 %v305, 20
    %v313 = vpop.permute.xlu0 %312
    %314 = vrot.lane.b32.xlu0 %v307, 20
    %v315 = vpop.permute.xlu0 %314
    %vm320 = vcmask 195747
    %321 = vst.msk [vmem:[#allocation2 - $0x1] sm:$0xf8] %vm320, %v309
    %vm322 = vcmask 190624
    %323 = vst.msk [vmem:[#allocation2 + $0x7] sm:$0x7] %vm322, %v311
    %324 = vst.msk [vmem:[#allocation2 + $0xf] sm:$0xf8] %vm320, %v313
    %325 = vst.msk [vmem:[#allocation2 + $0x17] sm:$0x7] %vm322, %v315
    %v326 = vsel %vm205, %v192, %v154
    %v327 = vsel %vm208, %v195, %v326
    %v328 = vsel %vm211, %v198, %v327
    %v329 = vsel %vm193, %v204, %v201
    %v330 = vsel %vm196, %v207, %v329
    %v331 = vsel %vm199, %v210, %v330
    %v332 = vsel %vm205, %v213, %v162
    %v333 = vsel %vm208, %v215, %v332
    %v334 = vsel %vm211, %v217, %v333
    %v335 = vsel %vm193, %v221, %v219
    %v336 = vsel %vm196, %v223, %v335
    %v337 = vsel %vm199, %v225, %v336
    %338 = vrot.lane.b32.xlu0 %v328, 24
    %v339 = vpop.permute.xlu0 %338
    %340 = vrot.lane.b32.xlu0 %v331, 24
    %v341 = vpop.permute.xlu0 %340
    %342 = vrot.lane.b32.xlu0 %v334, 24
    %v343 = vpop.permute.xlu0 %342
    %344 = vrot.lane.b32.xlu0 %v337, 24
    %v345 = vpop.permute.xlu0 %344
    %vm350 = vcmask 228548
    %351 = vst.msk [vmem:[#allocation2 - $0x2] sm:$0xf0] %vm350, %v339
    %vm352 = vcmask 224448
    %353 = vst.msk [vmem:[#allocation2 + $0x6] sm:$0xf] %vm352, %v341
    %354 = vst.msk [vmem:[#allocation2 + $0xe] sm:$0xf0] %vm350, %v343
    %355 = vst.msk [vmem:[#allocation2 + $0x16] sm:$0xf] %vm352, %v345
    %v356 = vsel %vm208, %v192, %v154
    %v357 = vsel %vm211, %v195, %v356
    %v358 = vsel %vm193, %v201, %v198
    %v359 = vsel %vm196, %v204, %v358
    %v360 = vsel %vm199, %v207, %v359
    %v361 = vsel %vm202, %v210, %v360
    %v362 = vsel %vm208, %v213, %v162
    %v363 = vsel %vm211, %v215, %v362
    %v364 = vsel %vm193, %v219, %v217
    %v365 = vsel %vm196, %v221, %v364
    %v366 = vsel %vm199, %v223, %v365
    %v367 = vsel %vm202, %v225, %v366
    %368 = vrot.lane.b32.xlu0 %v357, 28
    %v369 = vpop.permute.xlu0 %368
    %370 = vrot.lane.b32.xlu0 %v361, 28
    %v371 = vpop.permute.xlu0 %370
    %372 = vrot.lane.b32.xlu0 %v363, 28
    %v373 = vpop.permute.xlu0 %372
    %374 = vrot.lane.b32.xlu0 %v367, 28
    %v375 = vpop.permute.xlu0 %374
    %vm380 = vcmask 261349
    %381 = vst.msk [vmem:[#allocation2 - $0x3] sm:$0xe0] %vm380, %v369
    %vm382 = vcmask 258272
    %383 = vst.msk [vmem:[#allocation2 + $0x5] sm:$0x1f] %vm382, %v371
    %384 = vst.msk [vmem:[#allocation2 + $0xd] sm:$0xe0] %vm380, %v373
    %385 = vst.msk [vmem:[#allocation2 + $0x15] sm:$0x1f] %vm382, %v375
    %v386 = vsel %vm211, %v192, %v154
    %v387 = vsel %vm193, %v198, %v195
    %v388 = vsel %vm196, %v201, %v387
    %v389 = vsel %vm199, %v204, %v388
    %v390 = vsel %vm202, %v207, %v389
    %v391 = vsel %vm205, %v210, %v390
    %v392 = vsel %vm211, %v213, %v162
    %v393 = vsel %vm193, %v217, %v215
    %v394 = vsel %vm196, %v219, %v393
    %v395 = vsel %vm199, %v221, %v394
    %v396 = vsel %vm202, %v223, %v395
    %v397 = vsel %vm205, %v225, %v396
    %398 = vrot.lane.b32.xlu0 %v386, 32
    %v399 = vpop.permute.xlu0 %398
    %400 = vrot.lane.b32.xlu0 %v391, 32
    %v401 = vpop.permute.xlu0 %400
    %402 = vrot.lane.b32.xlu0 %v392, 32
    %v403 = vpop.permute.xlu0 %402
    %404 = vrot.lane.b32.xlu0 %v397, 32
    %v405 = vpop.permute.xlu0 %404
    %vm410 = vcmask 294150
    %411 = vst.msk [vmem:[#allocation2 - $0x4] sm:$0xc0] %vm410, %v399
    %vm412 = vcmask 292096
    %413 = vst.msk [vmem:[#allocation2 + $0x4] sm:$0x3f] %vm412, %v401
    %414 = vst.msk [vmem:[#allocation2 + $0xc] sm:$0xc0] %vm410, %v403
    %415 = vst.msk [vmem:[#allocation2 + $0x14] sm:$0x3f] %vm412, %v405
    %v416 = vsel %vm193, %v195, %v192
    %v417 = vsel %vm196, %v198, %v416
    %v418 = vsel %vm199, %v201, %v417
    %v419 = vsel %vm202, %v204, %v418
    %v420 = vsel %vm205, %v207, %v419
    %v421 = vsel %vm208, %v210, %v420
    %v422 = vsel %vm193, %v215, %v213
    %v423 = vsel %vm196, %v217, %v422
    %v424 = vsel %vm199, %v219, %v423
    %v425 = vsel %vm202, %v221, %v424
    %v426 = vsel %vm205, %v223, %v425
    %v427 = vsel %vm208, %v225, %v426
    %428 = vrot.lane.b32.xlu0 %v154, 36
    %v429 = vpop.permute.xlu0 %428
    %430 = vrot.lane.b32.xlu0 %v421, 36
    %v431 = vpop.permute.xlu0 %430
    %432 = vrot.lane.b32.xlu0 %v162, 36
    %v433 = vpop.permute.xlu0 %432
    %434 = vrot.lane.b32.xlu0 %v427, 36
    %v435 = vpop.permute.xlu0 %434
    %vm440 = vcmask 326951
    %441 = vst.msk [vmem:[#allocation2 - $0x5] sm:$0x80] %vm440, %v429
    %vm442 = vcmask 325920
    %443 = vst.msk [vmem:[#allocation2 + $0x3] sm:$0x7f] %vm442, %v431
    %444 = vst.msk [vmem:[#allocation2 + $0xb] sm:$0x80] %vm440, %v433
    %445 = vst.msk [vmem:[#allocation2 + $0x13] sm:$0x7f] %vm442, %v435
    %v446 = vld [vmem:[#allocation2] sm:$0xff]
    %v447 = vld [vmem:[#allocation2 + $0x10] sm:$0xff]
    %v448 = vld [vmem:[%s1] sm:$0xff]
    %v449 = vld [vmem:[%s1 + $0x8] sm:$0xff]
    %v450 = vld [vmem:[%s1 + $0x10] sm:$0xff]
    %v451 = vld [vmem:[%s1 + $0x18] sm:$0xff]
    %v452 = vld [vmem:[%s1 + $0x20] sm:$0xff]
    %v453 = vld [vmem:[%s1 + $0x28] sm:$0xff]
    %v454 = vld [vmem:[#allocation2 + $0x1] sm:$0xff]
    %v455 = vld [vmem:[#allocation2 + $0x11] sm:$0xff]
    %s456 = scalar_lea.vmem %s1, 48
    %v457 = vld [vmem:[%s456] sm:$0xff]
    %v458 = vld [vmem:[%s456 + $0x8] sm:$0xff]
    %v459 = vld [vmem:[%s456 + $0x10] sm:$0xff]
    %v460 = vld [vmem:[%s456 + $0x18] sm:$0xff]
    %v461 = vld [vmem:[%s456 + $0x20] sm:$0xff]
    %v462 = vld [vmem:[%s456 + $0x28] sm:$0xff]
    %vm463 = vcmask 392192
    %v465 = vsel %vm463, %v454, 0
    %v468 = vsel %vm463, %v455, 0
    %470 = vmatprep.subr.mxu0 0.0
    %471 = vmatpush1.msra.mxu0 0.0
    %472 = vmatprep.subr.mxu0 0.0
    %473 = vmatpush1.msra.mxu0 0.0
    %474 = vmatprep.subr.mxu0 0.0
    %475 = vmatpush1.msra.mxu0 0.0
    %476 = vmatprep.subr.mxu0 0.0
    %477 = vmatpush1.msra.mxu0 0.0
    %478 = vmatprep.subr.mxu0 0.0
    %479 = vmatpush1.msra.mxu0 0.0
    %480 = vmatprep.subr.mxu0 0.0
    %481 = vmatpush1.msra.mxu0 0.0
    %482 = vmatprep.subr.mxu0 0.0
    %483 = vmatpush1.msra.mxu0 0.0
    %484 = vmatprep.subr.mxu0 0.0
    %485 = vmatpush1.msra.mxu0 0.0
    %486 = vmatprep.subr.mxu0 0.0
    %487 = vmatpush1.msra.mxu0 0.0
    %488 = vmatprep.subr.mxu0 0.0
    %489 = vmatpush1.msra.mxu0 0.0
    %490 = vmatprep.subr.mxu0 0.0
    %491 = vmatpush1.msra.mxu0 %v462
    %492 = vmatprep.subr.mxu0 0.0
    %493 = vmatpush1.msra.mxu0 %v461
    %494 = vmatprep.subr.mxu0 0.0
    %495 = vmatpush1.msra.mxu0 %v460
    %496 = vmatprep.subr.mxu0 0.0
    %497 = vmatpush1.msra.mxu0 %v459
    %498 = vmatprep.subr.mxu0 0.0
    %499 = vmatpush1.msra.mxu0 %v458
    %500 = vmatprep.subr.mxu0 0.0
    %501 = vmatpush1.msra.mxu0 %v457
    %502 = vmatprep.subr.mxu0 0.0
    %503 = vmatpush2.msra.mxu0 0.0
    %504 = vmatprep.subr.mxu0 0.0
    %505 = vmatpush2.msra.mxu0 0.0
    %506 = vmatprep.subr.mxu0 0.0
    %507 = vmatpush2.msra.mxu0 0.0
    %508 = vmatprep.subr.mxu0 0.0
    %509 = vmatpush2.msra.mxu0 0.0
    %510 = vmatprep.subr.mxu0 0.0
    %511 = vmatpush2.msra.mxu0 0.0
    %512 = vmatprep.subr.mxu0 0.0
    %513 = vmatpush2.msra.mxu0 0.0
    %514 = vmatprep.subr.mxu0 0.0
    %515 = vmatpush2.msra.mxu0 0.0
    %516 = vmatprep.subr.mxu0 0.0
    %517 = vmatpush2.msra.mxu0 0.0
    %518 = vmatprep.subr.mxu0 0.0
    %519 = vmatpush2.msra.mxu0 0.0
    %520 = vmatprep.subr.mxu0 0.0
    %521 = vmatpush2.msra.mxu0 0.0
    %522 = vmatprep.subr.mxu0 0.0
    %523 = vmatpush2.msra.mxu0 0.0
    %524 = vmatprep.subr.mxu0 0.0
    %525 = vmatpush2.msra.mxu0 0.0
    %526 = vmatprep.subr.mxu0 0.0
    %527 = vmatpush2.msra.mxu0 0.0
    %528 = vmatprep.subr.mxu0 0.0
    %529 = vmatpush2.msra.mxu0 0.0
    %530 = vmatprep.subr.mxu0 0.0
    %531 = vmatpush2.msra.mxu0 0.0
    %532 = vmatprep.subr.mxu0 0.0
    %533 = vmatpush2.msra.mxu0 0.0
    %534 = vmatprep.mubr.f32.mxu0 0.0
    %535 = vmatmul.mubr.f32.gmra.mxu0 %v465
    %v536 = vpop.f32.mrf.mxu0
    %v537 = vadd.f32 0.0, %v536
    %v538 = vpop.f32.mrf.mxu0
    %539 = vmatprep.mubr.f32.mxu0 0.0
    %540 = vmatmul.mubr.f32.gmra.mxu0 %v468
    %v541 = vpop.f32.mrf.mxu0
    %v542 = vadd.f32 0.0, %v541
    %v543 = vpop.f32.mrf.mxu0
    %544 = vdwg.mxu0
    %v546 = vsel %vm463, %v446, 0
    %v549 = vsel %vm463, %v447, 0
    %551 = vmatprep.subr.mxu0 0.0
    %552 = vmatpush1.msra.mxu0 0.0
    %553 = vmatprep.subr.mxu0 0.0
    %554 = vmatpush1.msra.mxu0 0.0
    %555 = vmatprep.subr.mxu0 0.0
    %556 = vmatpush1.msra.mxu0 0.0
    %557 = vmatprep.subr.mxu0 0.0
    %558 = vmatpush1.msra.mxu0 0.0
    %559 = vmatprep.subr.mxu0 0.0
    %560 = vmatpush1.msra.mxu0 0.0
    %561 = vmatprep.subr.mxu0 0.0
    %562 = vmatpush1.msra.mxu0 0.0
    %563 = vmatprep.subr.mxu0 0.0
    %564 = vmatpush1.msra.mxu0 0.0
    %565 = vmatprep.subr.mxu0 0.0
    %566 = vmatpush1.msra.mxu0 0.0
    %567 = vmatprep.subr.mxu0 0.0
    %568 = vmatpush1.msra.mxu0 0.0
    %569 = vmatprep.subr.mxu0 0.0
    %570 = vmatpush1.msra.mxu0 0.0
    %571 = vmatprep.subr.mxu0 0.0
    %572 = vmatpush1.msra.mxu0 %v453
    %573 = vmatprep.subr.mxu0 0.0
    %574 = vmatpush1.msra.mxu0 %v452
    %575 = vmatprep.subr.mxu0 0.0
    %576 = vmatpush1.msra.mxu0 %v451
    %577 = vmatprep.subr.mxu0 0.0
    %578 = vmatpush1.msra.mxu0 %v450
    %579 = vmatprep.subr.mxu0 0.0
    %580 = vmatpush1.msra.mxu0 %v449
    %581 = vmatprep.subr.mxu0 0.0
    %582 = vmatpush1.msra.mxu0 %v448
    %583 = vmatprep.subr.mxu0 0.0
    %584 = vmatpush2.msra.mxu0 0.0
    %585 = vmatprep.subr.mxu0 0.0
    %586 = vmatpush2.msra.mxu0 0.0
    %587 = vmatprep.subr.mxu0 0.0
    %588 = vmatpush2.msra.mxu0 0.0
    %589 = vmatprep.subr.mxu0 0.0
    %590 = vmatpush2.msra.mxu0 0.0
    %591 = vmatprep.subr.mxu0 0.0
    %592 = vmatpush2.msra.mxu0 0.0
    %593 = vmatprep.subr.mxu0 0.0
    %594 = vmatpush2.msra.mxu0 0.0
    %595 = vmatprep.subr.mxu0 0.0
    %596 = vmatpush2.msra.mxu0 0.0
    %597 = vmatprep.subr.mxu0 0.0
    %598 = vmatpush2.msra.mxu0 0.0
    %599 = vmatprep.subr.mxu0 0.0
    %600 = vmatpush2.msra.mxu0 0.0
    %601 = vmatprep.subr.mxu0 0.0
    %602 = vmatpush2.msra.mxu0 0.0
    %603 = vmatprep.subr.mxu0 0.0
    %604 = vmatpush2.msra.mxu0 0.0
    %605 = vmatprep.subr.mxu0 0.0
    %606 = vmatpush2.msra.mxu0 0.0
    %607 = vmatprep.subr.mxu0 0.0
    %608 = vmatpush2.msra.mxu0 0.0
    %609 = vmatprep.subr.mxu0 0.0
    %610 = vmatpush2.msra.mxu0 0.0
    %611 = vmatprep.subr.mxu0 0.0
    %612 = vmatpush2.msra.mxu0 0.0
    %613 = vmatprep.subr.mxu0 0.0
    %614 = vmatpush2.msra.mxu0 0.0
    %615 = vmatprep.mubr.f32.mxu0 0.0
    %616 = vmatmul.mubr.f32.gmra.mxu0 %v546
    %v617 = vpop.f32.mrf.mxu0
    %v618 = vadd.f32 %v537, %v617
    %v619 = vpop.f32.mrf.mxu0
    %620 = vmatprep.mubr.f32.mxu0 0.0
    %621 = vmatmul.mubr.f32.gmra.mxu0 %v549
    %v622 = vpop.f32.mrf.mxu0
    %v623 = vadd.f32 %v542, %v622
    %v624 = vpop.f32.mrf.mxu0
    %625 = vdwg.mxu0
    %v626 = vld [vmem:[#allocation2 + $0x2] sm:$0xff]
    %v627 = vld [vmem:[#allocation2 + $0x12] sm:$0xff]
    %s628 = scalar_lea.vmem %s1, 96
    %v629 = vld [vmem:[%s628] sm:$0xff]
    %v630 = vld [vmem:[%s628 + $0x8] sm:$0xff]
    %v631 = vld [vmem:[%s628 + $0x10] sm:$0xff]
    %v632 = vld [vmem:[%s628 + $0x18] sm:$0xff]
    %v633 = vld [vmem:[%s628 + $0x20] sm:$0xff]
    %v634 = vld [vmem:[%s628 + $0x28] sm:$0xff]
    %v636 = vsel %vm463, %v626, 0
    %v639 = vsel %vm463, %v627, 0
    %641 = vmatprep.subr.mxu0 0.0
    %642 = vmatpush1.msra.mxu0 0.0
    %643 = vmatprep.subr.mxu0 0.0
    %644 = vmatpush1.msra.mxu0 0.0
    %645 = vmatprep.subr.mxu0 0.0
    %646 = vmatpush1.msra.mxu0 0.0
    %647 = vmatprep.subr.mxu0 0.0
    %648 = vmatpush1.msra.mxu0 0.0
    %649 = vmatprep.subr.mxu0 0.0
    %650 = vmatpush1.msra.mxu0 0.0
    %651 = vmatprep.subr.mxu0 0.0
    %652 = vmatpush1.msra.mxu0 0.0
    %653 = vmatprep.subr.mxu0 0.0
    %654 = vmatpush1.msra.mxu0 0.0
    %655 = vmatprep.subr.mxu0 0.0
    %656 = vmatpush1.msra.mxu0 0.0
    %657 = vmatprep.subr.mxu0 0.0
    %658 = vmatpush1.msra.mxu0 0.0
    %659 = vmatprep.subr.mxu0 0.0
    %660 = vmatpush1.msra.mxu0 0.0
    %661 = vmatprep.subr.mxu0 0.0
    %662 = vmatpush1.msra.mxu0 %v634
    %663 = vmatprep.subr.mxu0 0.0
    %664 = vmatpush1.msra.mxu0 %v633
    %665 = vmatprep.subr.mxu0 0.0
    %666 = vmatpush1.msra.mxu0 %v632
    %667 = vmatprep.subr.mxu0 0.0
    %668 = vmatpush1.msra.mxu0 %v631
    %669 = vmatprep.subr.mxu0 0.0
    %670 = vmatpush1.msra.mxu0 %v630
    %671 = vmatprep.subr.mxu0 0.0
    %672 = vmatpush1.msra.mxu0 %v629
    %673 = vmatprep.subr.mxu0 0.0
    %674 = vmatpush2.msra.mxu0 0.0
    %675 = vmatprep.subr.mxu0 0.0
    %676 = vmatpush2.msra.mxu0 0.0
    %677 = vmatprep.subr.mxu0 0.0
    %678 = vmatpush2.msra.mxu0 0.0
    %679 = vmatprep.subr.mxu0 0.0
    %680 = vmatpush2.msra.mxu0 0.0
    %681 = vmatprep.subr.mxu0 0.0
    %682 = vmatpush2.msra.mxu0 0.0
    %683 = vmatprep.subr.mxu0 0.0
    %684 = vmatpush2.msra.mxu0 0.0
    %685 = vmatprep.subr.mxu0 0.0
    %686 = vmatpush2.msra.mxu0 0.0
    %687 = vmatprep.subr.mxu0 0.0
    %688 = vmatpush2.msra.mxu0 0.0
    %689 = vmatprep.subr.mxu0 0.0
    %690 = vmatpush2.msra.mxu0 0.0
    %691 = vmatprep.subr.mxu0 0.0
    %692 = vmatpush2.msra.mxu0 0.0
    %693 = vmatprep.subr.mxu0 0.0
    %694 = vmatpush2.msra.mxu0 0.0
    %695 = vmatprep.subr.mxu0 0.0
    %696 = vmatpush2.msra.mxu0 0.0
    %697 = vmatprep.subr.mxu0 0.0
    %698 = vmatpush2.msra.mxu0 0.0
    %699 = vmatprep.subr.mxu0 0.0
    %700 = vmatpush2.msra.mxu0 0.0
    %701 = vmatprep.subr.mxu0 0.0
    %702 = vmatpush2.msra.mxu0 0.0
    %703 = vmatprep.subr.mxu0 0.0
    %704 = vmatpush2.msra.mxu0 0.0
    %705 = vmatprep.mubr.f32.mxu0 0.0
    %706 = vmatmul.mubr.f32.gmra.mxu0 %v636
    %v707 = vpop.f32.mrf.mxu0
    %v708 = vadd.f32 0.0, %v707
    %v709 = vpop.f32.mrf.mxu0
    %710 = vmatprep.mubr.f32.mxu0 0.0
    %711 = vmatmul.mubr.f32.gmra.mxu0 %v639
    %v712 = vpop.f32.mrf.mxu0
    %v713 = vadd.f32 0.0, %v712
    %v714 = vpop.f32.mrf.mxu0
    %715 = vdwg.mxu0
    %v716 = vadd.f32 %v618, %v708
    %v717 = vadd.f32 %v623, %v713
    %v718 = vld [vmem:[#allocation2 + $0x3] sm:$0xff]
    %v719 = vld [vmem:[#allocation2 + $0x13] sm:$0xff]
    %s720 = scalar_lea.vmem %s1, 144
    %v721 = vld [vmem:[%s720] sm:$0xff]
    %v722 = vld [vmem:[%s720 + $0x8] sm:$0xff]
    %v723 = vld [vmem:[%s720 + $0x10] sm:$0xff]
    %v724 = vld [vmem:[%s720 + $0x18] sm:$0xff]
    %v725 = vld [vmem:[%s720 + $0x20] sm:$0xff]
    %v726 = vld [vmem:[%s720 + $0x28] sm:$0xff]
    %v728 = vsel %vm463, %v718, 0
    %v731 = vsel %vm463, %v719, 0
    %733 = vmatprep.subr.mxu0 0.0
    %734 = vmatpush1.msra.mxu0 0.0
    %735 = vmatprep.subr.mxu0 0.0
    %736 = vmatpush1.msra.mxu0 0.0
    %737 = vmatprep.subr.mxu0 0.0
    %738 = vmatpush1.msra.mxu0 0.0
    %739 = vmatprep.subr.mxu0 0.0
    %740 = vmatpush1.msra.mxu0 0.0
    %741 = vmatprep.subr.mxu0 0.0
    %742 = vmatpush1.msra.mxu0 0.0
    %743 = vmatprep.subr.mxu0 0.0
    %744 = vmatpush1.msra.mxu0 0.0
    %745 = vmatprep.subr.mxu0 0.0
    %746 = vmatpush1.msra.mxu0 0.0
    %747 = vmatprep.subr.mxu0 0.0
    %748 = vmatpush1.msra.mxu0 0.0
    %749 = vmatprep.subr.mxu0 0.0
    %750 = vmatpush1.msra.mxu0 0.0
    %751 = vmatprep.subr.mxu0 0.0
    %752 = vmatpush1.msra.mxu0 0.0
    %753 = vmatprep.subr.mxu0 0.0
    %754 = vmatpush1.msra.mxu0 %v726
    %755 = vmatprep.subr.mxu0 0.0
    %756 = vmatpush1.msra.mxu0 %v725
    %757 = vmatprep.subr.mxu0 0.0
    %758 = vmatpush1.msra.mxu0 %v724
    %759 = vmatprep.subr.mxu0 0.0
    %760 = vmatpush1.msra.mxu0 %v723
    %761 = vmatprep.subr.mxu0 0.0
    %762 = vmatpush1.msra.mxu0 %v722
    %763 = vmatprep.subr.mxu0 0.0
    %764 = vmatpush1.msra.mxu0 %v721
    %765 = vmatprep.subr.mxu0 0.0
    %766 = vmatpush2.msra.mxu0 0.0
    %767 = vmatprep.subr.mxu0 0.0
    %768 = vmatpush2.msra.mxu0 0.0
    %769 = vmatprep.subr.mxu0 0.0
    %770 = vmatpush2.msra.mxu0 0.0
    %771 = vmatprep.subr.mxu0 0.0
    %772 = vmatpush2.msra.mxu0 0.0
    %773 = vmatprep.subr.mxu0 0.0
    %774 = vmatpush2.msra.mxu0 0.0
    %775 = vmatprep.subr.mxu0 0.0
    %776 = vmatpush2.msra.mxu0 0.0
    %777 = vmatprep.subr.mxu0 0.0
    %778 = vmatpush2.msra.mxu0 0.0
    %779 = vmatprep.subr.mxu0 0.0
    %780 = vmatpush2.msra.mxu0 0.0
    %781 = vmatprep.subr.mxu0 0.0
    %782 = vmatpush2.msra.mxu0 0.0
    %783 = vmatprep.subr.mxu0 0.0
    %784 = vmatpush2.msra.mxu0 0.0
    %785 = vmatprep.subr.mxu0 0.0
    %786 = vmatpush2.msra.mxu0 0.0
    %787 = vmatprep.subr.mxu0 0.0
    %788 = vmatpush2.msra.mxu0 0.0
    %789 = vmatprep.subr.mxu0 0.0
    %790 = vmatpush2.msra.mxu0 0.0
    %791 = vmatprep.subr.mxu0 0.0
    %792 = vmatpush2.msra.mxu0 0.0
    %793 = vmatprep.subr.mxu0 0.0
    %794 = vmatpush2.msra.mxu0 0.0
    %795 = vmatprep.subr.mxu0 0.0
    %796 = vmatpush2.msra.mxu0 0.0
    %797 = vmatprep.mubr.f32.mxu0 0.0
    %798 = vmatmul.mubr.f32.gmra.mxu0 %v728
    %v799 = vpop.f32.mrf.mxu0
    %v800 = vadd.f32 0.0, %v799
    %v801 = vpop.f32.mrf.mxu0
    %802 = vmatprep.mubr.f32.mxu0 0.0
    %803 = vmatmul.mubr.f32.gmra.mxu0 %v731
    %v804 = vpop.f32.mrf.mxu0
    %v805 = vadd.f32 0.0, %v804
    %v806 = vpop.f32.mrf.mxu0
    %807 = vdwg.mxu0
    %v808 = vadd.f32 %v716, %v800
    %v809 = vadd.f32 %v717, %v805
    %v810 = vld [vmem:[#allocation2 + $0x4] sm:$0xff]
    %v811 = vld [vmem:[#allocation2 + $0x14] sm:$0xff]
    %s812 = scalar_lea.vmem %s1, 192
    %v813 = vld [vmem:[%s812] sm:$0xff]
    %v814 = vld [vmem:[%s812 + $0x8] sm:$0xff]
    %v815 = vld [vmem:[%s812 + $0x10] sm:$0xff]
    %v816 = vld [vmem:[%s812 + $0x18] sm:$0xff]
    %v817 = vld [vmem:[%s812 + $0x20] sm:$0xff]
    %v818 = vld [vmem:[%s812 + $0x28] sm:$0xff]
    %v820 = vsel %vm463, %v810, 0
    %v823 = vsel %vm463, %v811, 0
    %825 = vmatprep.subr.mxu0 0.0
    %826 = vmatpush1.msra.mxu0 0.0
    %827 = vmatprep.subr.mxu0 0.0
    %828 = vmatpush1.msra.mxu0 0.0
    %829 = vmatprep.subr.mxu0 0.0
    %830 = vmatpush1.msra.mxu0 0.0
    %831 = vmatprep.subr.mxu0 0.0
    %832 = vmatpush1.msra.mxu0 0.0
    %833 = vmatprep.subr.mxu0 0.0
    %834 = vmatpush1.msra.mxu0 0.0
    %835 = vmatprep.subr.mxu0 0.0
    %836 = vmatpush1.msra.mxu0 0.0
    %837 = vmatprep.subr.mxu0 0.0
    %838 = vmatpush1.msra.mxu0 0.0
    %839 = vmatprep.subr.mxu0 0.0
    %840 = vmatpush1.msra.mxu0 0.0
    %841 = vmatprep.subr.mxu0 0.0
    %842 = vmatpush1.msra.mxu0 0.0
    %843 = vmatprep.subr.mxu0 0.0
    %844 = vmatpush1.msra.mxu0 0.0
    %845 = vmatprep.subr.mxu0 0.0
    %846 = vmatpush1.msra.mxu0 %v818
    %847 = vmatprep.subr.mxu0 0.0
    %848 = vmatpush1.msra.mxu0 %v817
    %849 = vmatprep.subr.mxu0 0.0
    %850 = vmatpush1.msra.mxu0 %v816
    %851 = vmatprep.subr.mxu0 0.0
    %852 = vmatpush1.msra.mxu0 %v815
    %853 = vmatprep.subr.mxu0 0.0
    %854 = vmatpush1.msra.mxu0 %v814
    %855 = vmatprep.subr.mxu0 0.0
    %856 = vmatpush1.msra.mxu0 %v813
    %857 = vmatprep.subr.mxu0 0.0
    %858 = vmatpush2.msra.mxu0 0.0
    %859 = vmatprep.subr.mxu0 0.0
    %860 = vmatpush2.msra.mxu0 0.0
    %861 = vmatprep.subr.mxu0 0.0
    %862 = vmatpush2.msra.mxu0 0.0
    %863 = vmatprep.subr.mxu0 0.0
    %864 = vmatpush2.msra.mxu0 0.0
    %865 = vmatprep.subr.mxu0 0.0
    %866 = vmatpush2.msra.mxu0 0.0
    %867 = vmatprep.subr.mxu0 0.0
    %868 = vmatpush2.msra.mxu0 0.0
    %869 = vmatprep.subr.mxu0 0.0
    %870 = vmatpush2.msra.mxu0 0.0
    %871 = vmatprep.subr.mxu0 0.0
    %872 = vmatpush2.msra.mxu0 0.0
    %873 = vmatprep.subr.mxu0 0.0
    %874 = vmatpush2.msra.mxu0 0.0
    %875 = vmatprep.subr.mxu0 0.0
    %876 = vmatpush2.msra.mxu0 0.0
    %877 = vmatprep.subr.mxu0 0.0
    %878 = vmatpush2.msra.mxu0 0.0
    %879 = vmatprep.subr.mxu0 0.0
    %880 = vmatpush2.msra.mxu0 0.0
    %881 = vmatprep.subr.mxu0 0.0
    %882 = vmatpush2.msra.mxu0 0.0
    %883 = vmatprep.subr.mxu0 0.0
    %884 = vmatpush2.msra.mxu0 0.0
    %885 = vmatprep.subr.mxu0 0.0
    %886 = vmatpush2.msra.mxu0 0.0
    %887 = vmatprep.subr.mxu0 0.0
    %888 = vmatpush2.msra.mxu0 0.0
    %889 = vmatprep.mubr.f32.mxu0 0.0
    %890 = vmatmul.mubr.f32.gmra.mxu0 %v820
    %v891 = vpop.f32.mrf.mxu0
    %v892 = vadd.f32 0.0, %v891
    %v893 = vpop.f32.mrf.mxu0
    %894 = vmatprep.mubr.f32.mxu0 0.0
    %895 = vmatmul.mubr.f32.gmra.mxu0 %v823
    %v896 = vpop.f32.mrf.mxu0
    %v897 = vadd.f32 0.0, %v896
    %v898 = vpop.f32.mrf.mxu0
    %899 = vdwg.mxu0
    %v900 = vadd.f32 %v808, %v892
    %v901 = vadd.f32 %v809, %v897
    %v902 = vld [vmem:[%s3] sm:$0x1]
    %v903 = vld [vmem:[%s4] sm:$0x1]
    %vm904 = vcmask 523264
    %v906 = vsel %vm904, %v900, 0
    %v909 = vsel %vm904, %v901, 0
    %911 = vmatprep.subr.mxu0 0.0
    %912 = vmatpush1.msra.mxu0 0.0
    %913 = vmatprep.subr.mxu0 0.0
    %914 = vmatpush1.msra.mxu0 0.0
    %915 = vmatprep.subr.mxu0 0.0
    %916 = vmatpush1.msra.mxu0 0.0
    %917 = vmatprep.subr.mxu0 0.0
    %918 = vmatpush1.msra.mxu0 0.0
    %919 = vmatprep.subr.mxu0 0.0
    %920 = vmatpush1.msra.mxu0 0.0
    %921 = vmatprep.subr.mxu0 0.0
    %922 = vmatpush1.msra.mxu0 0.0
    %923 = vmatprep.subr.mxu0 0.0
    %924 = vmatpush1.msra.mxu0 0.0
    %925 = vmatprep.subr.mxu0 0.0
    %926 = vmatpush1.msra.mxu0 0.0
    %927 = vmatprep.subr.mxu0 0.0
    %928 = vmatpush1.msra.mxu0 %v40
    %929 = vmatprep.subr.mxu0 0.0
    %930 = vmatpush1.msra.mxu0 %v39
    %931 = vmatprep.subr.mxu0 0.0
    %932 = vmatpush1.msra.mxu0 %v38
    %933 = vmatprep.subr.mxu0 0.0
    %934 = vmatpush1.msra.mxu0 %v37
    %935 = vmatprep.subr.mxu0 0.0
    %936 = vmatpush1.msra.mxu0 %v36
    %937 = vmatprep.subr.mxu0 0.0
    %938 = vmatpush1.msra.mxu0 %v35
    %939 = vmatprep.subr.mxu0 0.0
    %940 = vmatpush1.msra.mxu0 %v34
    %941 = vmatprep.subr.mxu0 0.0
    %942 = vmatpush1.msra.mxu0 %v33
    %943 = vmatprep.subr.mxu0 0.0
    %944 = vmatpush2.msra.mxu0 0.0
    %945 = vmatprep.subr.mxu0 0.0
    %946 = vmatpush2.msra.mxu0 0.0
    %947 = vmatprep.subr.mxu0 0.0
    %948 = vmatpush2.msra.mxu0 0.0
    %949 = vmatprep.subr.mxu0 0.0
    %950 = vmatpush2.msra.mxu0 0.0
    %951 = vmatprep.subr.mxu0 0.0
    %952 = vmatpush2.msra.mxu0 0.0
    %953 = vmatprep.subr.mxu0 0.0
    %954 = vmatpush2.msra.mxu0 0.0
    %955 = vmatprep.subr.mxu0 0.0
    %956 = vmatpush2.msra.mxu0 0.0
    %957 = vmatprep.subr.mxu0 0.0
    %958 = vmatpush2.msra.mxu0 0.0
    %959 = vmatprep.subr.mxu0 0.0
    %960 = vmatpush2.msra.mxu0 0.0
    %961 = vmatprep.subr.mxu0 0.0
    %962 = vmatpush2.msra.mxu0 0.0
    %963 = vmatprep.subr.mxu0 0.0
    %964 = vmatpush2.msra.mxu0 0.0
    %965 = vmatprep.subr.mxu0 0.0
    %966 = vmatpush2.msra.mxu0 0.0
    %967 = vmatprep.subr.mxu0 0.0
    %968 = vmatpush2.msra.mxu0 0.0
    %969 = vmatprep.subr.mxu0 0.0
    %970 = vmatpush2.msra.mxu0 0.0
    %971 = vmatprep.subr.mxu0 0.0
    %972 = vmatpush2.msra.mxu0 0.0
    %973 = vmatprep.subr.mxu0 0.0
    %974 = vmatpush2.msra.mxu0 0.0
    %975 = vmatprep.mubr.f32.mxu0 0.0
    %976 = vmatmul.mubr.f32.gmra.mxu0 %v906
    %v977 = vpop.f32.mrf.mxu0
    %v978 = vadd.f32 0.0, %v977
    %v979 = vpop.f32.mrf.mxu0
    %980 = vmatprep.mubr.f32.mxu0 0.0
    %981 = vmatmul.mubr.f32.gmra.mxu0 %v909
    %v982 = vpop.f32.mrf.mxu0
    %v983 = vadd.f32 0.0, %v982
    %v984 = vpop.f32.mrf.mxu0
    %985 = vdwg.mxu0
    %v986 = vmul.f32 %v900, %v900
    %v987 = vmul.f32 %v901, %v901
    %v989 = vsel %vm904, %v986, 0
    %v992 = vsel %vm904, %v987, 0
    %994 = vmatprep.subr.mxu0 0.0
    %995 = vmatpush1.msra.mxu0 0.0
    %996 = vmatprep.subr.mxu0 0.0
    %997 = vmatpush1.msra.mxu0 0.0
    %998 = vmatprep.subr.mxu0 0.0
    %999 = vmatpush1.msra.mxu0 0.0
    %1000 = vmatprep.subr.mxu0 0.0
    %1001 = vmatpush1.msra.mxu0 0.0
    %1002 = vmatprep.subr.mxu0 0.0
    %1003 = vmatpush1.msra.mxu0 0.0
    %1004 = vmatprep.subr.mxu0 0.0
    %1005 = vmatpush1.msra.mxu0 0.0
    %1006 = vmatprep.subr.mxu0 0.0
    %1007 = vmatpush1.msra.mxu0 0.0
    %1008 = vmatprep.subr.mxu0 0.0
    %1009 = vmatpush1.msra.mxu0 0.0
    %1010 = vmatprep.subr.mxu0 0.0
    %1011 = vmatpush1.msra.mxu0 %v40
    %1012 = vmatprep.subr.mxu0 0.0
    %1013 = vmatpush1.msra.mxu0 %v39
    %1014 = vmatprep.subr.mxu0 0.0
    %1015 = vmatpush1.msra.mxu0 %v38
    %1016 = vmatprep.subr.mxu0 0.0
    %1017 = vmatpush1.msra.mxu0 %v37
    %1018 = vmatprep.subr.mxu0 0.0
    %1019 = vmatpush1.msra.mxu0 %v36
    %1020 = vmatprep.subr.mxu0 0.0
    %1021 = vmatpush1.msra.mxu0 %v35
    %1022 = vmatprep.subr.mxu0 0.0
    %1023 = vmatpush1.msra.mxu0 %v34
    %1024 = vmatprep.subr.mxu0 0.0
    %1025 = vmatpush1.msra.mxu0 %v33
    %1026 = vmatprep.subr.mxu0 0.0
    %1027 = vmatpush2.msra.mxu0 0.0
    %1028 = vmatprep.subr.mxu0 0.0
    %1029 = vmatpush2.msra.mxu0 0.0
    %1030 = vmatprep.subr.mxu0 0.0
    %1031 = vmatpush2.msra.mxu0 0.0
    %1032 = vmatprep.subr.mxu0 0.0
    %1033 = vmatpush2.msra.mxu0 0.0
    %1034 = vmatprep.subr.mxu0 0.0
    %1035 = vmatpush2.msra.mxu0 0.0
    %1036 = vmatprep.subr.mxu0 0.0
    %1037 = vmatpush2.msra.mxu0 0.0
    %1038 = vmatprep.subr.mxu0 0.0
    %1039 = vmatpush2.msra.mxu0 0.0
    %1040 = vmatprep.subr.mxu0 0.0
    %1041 = vmatpush2.msra.mxu0 0.0
    %1042 = vmatprep.subr.mxu0 0.0
    %1043 = vmatpush2.msra.mxu0 0.0
    %1044 = vmatprep.subr.mxu0 0.0
    %1045 = vmatpush2.msra.mxu0 0.0
    %1046 = vmatprep.subr.mxu0 0.0
    %1047 = vmatpush2.msra.mxu0 0.0
    %1048 = vmatprep.subr.mxu0 0.0
    %1049 = vmatpush2.msra.mxu0 0.0
    %1050 = vmatprep.subr.mxu0 0.0
    %1051 = vmatpush2.msra.mxu0 0.0
    %1052 = vmatprep.subr.mxu0 0.0
    %1053 = vmatpush2.msra.mxu0 0.0
    %1054 = vmatprep.subr.mxu0 0.0
    %1055 = vmatpush2.msra.mxu0 0.0
    %1056 = vmatprep.subr.mxu0 0.0
    %1057 = vmatpush2.msra.mxu0 0.0
    %1058 = vmatprep.mubr.f32.mxu0 0.0
    %1059 = vmatmul.mubr.f32.gmra.mxu0 %v989
    %v1060 = vpop.f32.mrf.mxu0
    %v1061 = vadd.f32 0.0, %v1060
    %v1062 = vpop.f32.mrf.mxu0
    %1063 = vmatprep.mubr.f32.mxu0 0.0
    %1064 = vmatmul.mubr.f32.gmra.mxu0 %v992
    %v1065 = vpop.f32.mrf.mxu0
    %v1066 = vadd.f32 0.0, %v1065
    %v1067 = vpop.f32.mrf.mxu0
    %1068 = vdwg.mxu0
    %vm1069 = vcmask 64512
    %v1070 = vsel %vm1069, %v978, 0.0
    %v1071 = vsel %vm1069, %v983, 0.0
    %v1072 = vadd.f32 %v1070, %v1071
    %v1073 = vrot.slane %v1072, 4
    %v1074 = vadd.f32 %v1072, %v1073
    %v1075 = vrot.slane %v1074, 2
    %v1076 = vadd.f32 %v1074, %v1075
    %v1077 = vrot.slane %v1076, 1
    %v1078 = vadd.f32 %v1076, %v1077
    %v1079 = vmul.f32 %v1078, 0.0078125
    %v1080 = vsel %vm1069, %v1061, 0.0
    %v1081 = vsel %vm1069, %v1066, 0.0
    %v1082 = vadd.f32 %v1080, %v1081
    %v1083 = vrot.slane %v1082, 4
    %v1084 = vadd.f32 %v1082, %v1083
    %v1085 = vrot.slane %v1084, 2
    %v1086 = vadd.f32 %v1084, %v1085
    %v1087 = vrot.slane %v1086, 1
    %v1088 = vadd.f32 %v1086, %v1087
    %v1089 = vmul.f32 %v1088, 0.0078125
    %v1090 = vmul.f32 %v1079, %v1079
    %v1091 = vsub.f32 %v1089, %v1090
    %v1092 = vmax.f32 %v1091, 0.0
    %v1093 = vadd.f32 %v1092, 1e-05
    %v1094 = vrsqrt.pop %v1093
    %v1095 = vmul.f32 %v902, %v1094
    %v1096 = vmul.f32 %v1079, %v1095
    %v1097 = vsub.f32 %v903, %v1096
    %v1099 = vsel %vm1069, %v1095, 0
    %1101 = vmatprep.subr.mxu0 0.0
    %1102 = vmatpush1.msra.mxu0 0.0
    %1103 = vmatprep.subr.mxu0 0.0
    %1104 = vmatpush1.msra.mxu0 0.0
    %1105 = vmatprep.subr.mxu0 0.0
    %1106 = vmatpush1.msra.mxu0 0.0
    %1107 = vmatprep.subr.mxu0 0.0
    %1108 = vmatpush1.msra.mxu0 0.0
    %1109 = vmatprep.subr.mxu0 0.0
    %1110 = vmatpush1.msra.mxu0 0.0
    %1111 = vmatprep.subr.mxu0 0.0
    %1112 = vmatpush1.msra.mxu0 0.0
    %1113 = vmatprep.subr.mxu0 0.0
    %1114 = vmatpush1.msra.mxu0 0.0
    %1115 = vmatprep.subr.mxu0 0.0
    %1116 = vmatpush1.msra.mxu0 0.0
    %1117 = vmatprep.subr.mxu0 0.0
    %1118 = vmatpush1.msra.mxu0 0.0
    %1119 = vmatprep.subr.mxu0 0.0
    %1120 = vmatpush1.msra.mxu0 0.0
    %1121 = vmatprep.subr.mxu0 0.0
    %1122 = vmatpush1.msra.mxu0 0.0
    %1123 = vmatprep.subr.mxu0 0.0
    %1124 = vmatpush1.msra.mxu0 0.0
    %1125 = vmatprep.subr.mxu0 0.0
    %1126 = vmatpush1.msra.mxu0 0.0
    %1127 = vmatprep.subr.mxu0 0.0
    %1128 = vmatpush1.msra.mxu0 0.0
    %1129 = vmatprep.subr.mxu0 0.0
    %1130 = vmatpush1.msra.mxu0 0.0
    %1131 = vmatprep.subr.mxu0 0.0
    %1132 = vmatpush1.msra.mxu0 %v41
    %1133 = vmatprep.subr.mxu0 0.0
    %1134 = vmatpush2.msra.mxu0 0.0
    %1135 = vmatprep.subr.mxu0 0.0
    %1136 = vmatpush2.msra.mxu0 0.0
    %1137 = vmatprep.subr.mxu0 0.0
    %1138 = vmatpush2.msra.mxu0 0.0
    %1139 = vmatprep.subr.mxu0 0.0
    %1140 = vmatpush2.msra.mxu0 0.0
    %1141 = vmatprep.subr.mxu0 0.0
    %1142 = vmatpush2.msra.mxu0 0.0
    %1143 = vmatprep.subr.mxu0 0.0
    %1144 = vmatpush2.msra.mxu0 0.0
    %1145 = vmatprep.subr.mxu0 0.0
    %1146 = vmatpush2.msra.mxu0 0.0
    %1147 = vmatprep.subr.mxu0 0.0
    %1148 = vmatpush2.msra.mxu0 0.0
    %1149 = vmatprep.subr.mxu0 0.0
    %1150 = vmatpush2.msra.mxu0 0.0
    %1151 = vmatprep.subr.mxu0 0.0
    %1152 = vmatpush2.msra.mxu0 0.0
    %1153 = vmatprep.subr.mxu0 0.0
    %1154 = vmatpush2.msra.mxu0 0.0
    %1155 = vmatprep.subr.mxu0 0.0
    %1156 = vmatpush2.msra.mxu0 0.0
    %1157 = vmatprep.subr.mxu0 0.0
    %1158 = vmatpush2.msra.mxu0 0.0
    %1159 = vmatprep.subr.mxu0 0.0
    %1160 = vmatpush2.msra.mxu0 0.0
    %1161 = vmatprep.subr.mxu0 0.0
    %1162 = vmatpush2.msra.mxu0 0.0
    %1163 = vmatprep.subr.mxu0 0.0
    %1164 = vmatpush2.msra.mxu0 0.0
    %1165 = vmatprep.mubr.f32.mxu0 0.0
    %1166 = vmatmul.mubr.f32.gmra.mxu0 %v1099
    %v1167 = vpop.f32.mrf.mxu0
    %v1168 = vadd.f32 0.0, %v1167
    %v1169 = vpop.f32.mrf.mxu0
    %1170 = vdwg.mxu0
    %v1172 = vsel %vm1069, %v1097, 0
    %1174 = vmatprep.subr.mxu0 0.0
    %1175 = vmatpush1.msra.mxu0 0.0
    %1176 = vmatprep.subr.mxu0 0.0
    %1177 = vmatpush1.msra.mxu0 0.0
    %1178 = vmatprep.subr.mxu0 0.0
    %1179 = vmatpush1.msra.mxu0 0.0
    %1180 = vmatprep.subr.mxu0 0.0
    %1181 = vmatpush1.msra.mxu0 0.0
    %1182 = vmatprep.subr.mxu0 0.0
    %1183 = vmatpush1.msra.mxu0 0.0
    %1184 = vmatprep.subr.mxu0 0.0
    %1185 = vmatpush1.msra.mxu0 0.0
    %1186 = vmatprep.subr.mxu0 0.0
    %1187 = vmatpush1.msra.mxu0 0.0
    %1188 = vmatprep.subr.mxu0 0.0
    %1189 = vmatpush1.msra.mxu0 0.0
    %1190 = vmatprep.subr.mxu0 0.0
    %1191 = vmatpush1.msra.mxu0 0.0
    %1192 = vmatprep.subr.mxu0 0.0
    %1193 = vmatpush1.msra.mxu0 0.0
    %1194 = vmatprep.subr.mxu0 0.0
    %1195 = vmatpush1.msra.mxu0 0.0
    %1196 = vmatprep.subr.mxu0 0.0
    %1197 = vmatpush1.msra.mxu0 0.0
    %1198 = vmatprep.subr.mxu0 0.0
    %1199 = vmatpush1.msra.mxu0 0.0
    %1200 = vmatprep.subr.mxu0 0.0
    %1201 = vmatpush1.msra.mxu0 0.0
    %1202 = vmatprep.subr.mxu0 0.0
    %1203 = vmatpush1.msra.mxu0 0.0
    %1204 = vmatprep.subr.mxu0 0.0
    %1205 = vmatpush1.msra.mxu0 %v41
    %1206 = vmatprep.subr.mxu0 0.0
    %1207 = vmatpush2.msra.mxu0 0.0
    %1208 = vmatprep.subr.mxu0 0.0
    %1209 = vmatpush2.msra.mxu0 0.0
    %1210 = vmatprep.subr.mxu0 0.0
    %1211 = vmatpush2.msra.mxu0 0.0
    %1212 = vmatprep.subr.mxu0 0.0
    %1213 = vmatpush2.msra.mxu0 0.0
    %1214 = vmatprep.subr.mxu0 0.0
    %1215 = vmatpush2.msra.mxu0 0.0
    %1216 = vmatprep.subr.mxu0 0.0
    %1217 = vmatpush2.msra.mxu0 0.0
    %1218 = vmatprep.subr.mxu0 0.0
    %1219 = vmatpush2.msra.mxu0 0.0
    %1220 = vmatprep.subr.mxu0 0.0
    %1221 = vmatpush2.msra.mxu0 0.0
    %1222 = vmatprep.subr.mxu0 0.0
    %1223 = vmatpush2.msra.mxu0 0.0
    %1224 = vmatprep.subr.mxu0 0.0
    %1225 = vmatpush2.msra.mxu0 0.0
    %1226 = vmatprep.subr.mxu0 0.0
    %1227 = vmatpush2.msra.mxu0 0.0
    %1228 = vmatprep.subr.mxu0 0.0
    %1229 = vmatpush2.msra.mxu0 0.0
    %1230 = vmatprep.subr.mxu0 0.0
    %1231 = vmatpush2.msra.mxu0 0.0
    %1232 = vmatprep.subr.mxu0 0.0
    %1233 = vmatpush2.msra.mxu0 0.0
    %1234 = vmatprep.subr.mxu0 0.0
    %1235 = vmatpush2.msra.mxu0 0.0
    %1236 = vmatprep.subr.mxu0 0.0
    %1237 = vmatpush2.msra.mxu0 0.0
    %1238 = vmatprep.mubr.f32.mxu0 0.0
    %1239 = vmatmul.mubr.f32.gmra.mxu0 %v1172
    %v1240 = vpop.f32.mrf.mxu0
    %v1241 = vadd.f32 0.0, %v1240
    %v1242 = vpop.f32.mrf.mxu0
    %1243 = vdwg.mxu0
    %v1244 = vlaneseq
    %v1245 = vshrl.u32 %v1244, 7
    %v1246 = vsub.s32 0, %v1245
    %v1247 = vrot.slane %v1168, %v1246
    %v1248 = vmul.f32 %v900, %v1247
    %v1249 = vmul.f32 %v901, %v1247
    %v1250 = vlaneseq
    %v1251 = vshrl.u32 %v1250, 7
    %v1252 = vsub.s32 0, %v1251
    %v1253 = vrot.slane %v1241, %v1252
    %v1254 = vadd.f32 %v1248, %v1253
    %v1255 = vadd.f32 %v1249, %v1253
    %v1256 = vmax.f32 %v1254, 0.0
    %v1257 = vmax.f32 %v1255, 0.0
    %1258 = vst.msk [vmem:[#allocation2] sm:$0xff] %vm170, 0.0
    %1259 = vst.msk [vmem:[#allocation2 + $0x8] sm:$0xf] %vm172, 0.0
    %1260 = vst.msk [vmem:[#allocation2 + $0x10] sm:$0xff] %vm170, 0.0
    %1261 = vst.msk [vmem:[#allocation2 + $0x18] sm:$0xf] %vm172, 0.0
    %1264 = vrot.lane.b32.xlu0 %v1256, 8
    %v1265 = vpop.permute.xlu0 %1264
    %1266 = vrot.lane.b32.xlu0 %v1257, 8
    %v1267 = vpop.permute.xlu0 %1266
    %vm1270 = vcmask 588864
    %1271 = vst.msk [vmem:[#allocation2 + $0x1] sm:$0xff] %vm1270, %v1265
    %1272 = vst.msk [vmem:[#allocation2 + $0x11] sm:$0xff] %vm1270, %v1267
    %v1273 = vld [vmem:[#allocation2] sm:$0xff]
    %v1274 = vld [vmem:[#allocation2 + $0x10] sm:$0xff]
    %v1275 = vld [vmem:[%s2] sm:$0xff]
    %v1276 = vld [vmem:[%s2 + $0x8] sm:$0xff]
    %v1277 = vld [vmem:[%s2 + $0x10] sm:$0xff]
    %v1278 = vld [vmem:[%s2 + $0x18] sm:$0xff]
    %v1279 = vld [vmem:[%s2 + $0x20] sm:$0xff]
    %v1280 = vld [vmem:[%s2 + $0x28] sm:$0xff]
    %v1281 = vld [vmem:[%s2 + $0x30] sm:$0xff]
    %v1282 = vld [vmem:[%s2 + $0x38] sm:$0xff]
    %v1283 = vld [vmem:[%s2 + $0x40] sm:$0xff]
    %v1284 = vld [vmem:[%s2 + $0x48] sm:$0xff]
    %v1285 = vld [vmem:[#allocation2 + $0x1] sm:$0xff]
    %v1286 = vld [vmem:[#allocation2 + $0x11] sm:$0xff]
    %s1287 = scalar_lea.vmem %s2, 80
    %v1288 = vld [vmem:[%s1287] sm:$0xff]
    %v1289 = vld [vmem:[%s1287 + $0x8] sm:$0xff]
    %v1290 = vld [vmem:[%s1287 + $0x10] sm:$0xff]
    %v1291 = vld [vmem:[%s1287 + $0x18] sm:$0xff]
    %v1292 = vld [vmem:[%s1287 + $0x20] sm:$0xff]
    %v1293 = vld [vmem:[%s1287 + $0x28] sm:$0xff]
    %v1294 = vld [vmem:[%s1287 + $0x30] sm:$0xff]
    %v1295 = vld [vmem:[%s1287 + $0x38] sm:$0xff]
    %v1296 = vld [vmem:[%s1287 + $0x40] sm:$0xff]
    %v1297 = vld [vmem:[%s1287 + $0x48] sm:$0xff]
    %v1299 = vsel %vm170, %v1285, 0
    %v1302 = vsel %vm170, %v1286, 0
    %1304 = vmatprep.subr.mxu0 0.0
    %1305 = vmatpush1.msra.mxu0 0.0
    %1306 = vmatprep.subr.mxu0 0.0
    %1307 = vmatpush1.msra.mxu0 0.0
    %1308 = vmatprep.subr.mxu0 0.0
    %1309 = vmatpush1.msra.mxu0 0.0
    %1310 = vmatprep.subr.mxu0 0.0
    %1311 = vmatpush1.msra.mxu0 0.0
    %1312 = vmatprep.subr.mxu0 0.0
    %1313 = vmatpush1.msra.mxu0 0.0
    %1314 = vmatprep.subr.mxu0 0.0
    %1315 = vmatpush1.msra.mxu0 0.0
    %1316 = vmatprep.subr.mxu0 0.0
    %1317 = vmatpush1.msra.mxu0 %v1297
    %1318 = vmatprep.subr.mxu0 0.0
    %1319 = vmatpush1.msra.mxu0 %v1296
    %1320 = vmatprep.subr.mxu0 0.0
    %1321 = vmatpush1.msra.mxu0 %v1295
    %1322 = vmatprep.subr.mxu0 0.0
    %1323 = vmatpush1.msra.mxu0 %v1294
    %1324 = vmatprep.subr.mxu0 0.0
    %1325 = vmatpush1.msra.mxu0 %v1293
    %1326 = vmatprep.subr.mxu0 0.0
    %1327 = vmatpush1.msra.mxu0 %v1292
    %1328 = vmatprep.subr.mxu0 0.0
    %1329 = vmatpush1.msra.mxu0 %v1291
    %1330 = vmatprep.subr.mxu0 0.0
    %1331 = vmatpush1.msra.mxu0 %v1290
    %1332 = vmatprep.subr.mxu0 0.0
    %1333 = vmatpush1.msra.mxu0 %v1289
    %1334 = vmatprep.subr.mxu0 0.0
    %1335 = vmatpush1.msra.mxu0 %v1288
    %1336 = vmatprep.subr.mxu0 0.0
    %1337 = vmatpush2.msra.mxu0 0.0
    %1338 = vmatprep.subr.mxu0 0.0
    %1339 = vmatpush2.msra.mxu0 0.0
    %1340 = vmatprep.subr.mxu0 0.0
    %1341 = vmatpush2.msra.mxu0 0.0
    %1342 = vmatprep.subr.mxu0 0.0
    %1343 = vmatpush2.msra.mxu0 0.0
    %1344 = vmatprep.subr.mxu0 0.0
    %1345 = vmatpush2.msra.mxu0 0.0
    %1346 = vmatprep.subr.mxu0 0.0
    %1347 = vmatpush2.msra.mxu0 0.0
    %1348 = vmatprep.subr.mxu0 0.0
    %1349 = vmatpush2.msra.mxu0 0.0
    %1350 = vmatprep.subr.mxu0 0.0
    %1351 = vmatpush2.msra.mxu0 0.0
    %1352 = vmatprep.subr.mxu0 0.0
    %1353 = vmatpush2.msra.mxu0 0.0
    %1354 = vmatprep.subr.mxu0 0.0
    %1355 = vmatpush2.msra.mxu0 0.0
    %1356 = vmatprep.subr.mxu0 0.0
    %1357 = vmatpush2.msra.mxu0 0.0
    %1358 = vmatprep.subr.mxu0 0.0
    %1359 = vmatpush2.msra.mxu0 0.0
    %1360 = vmatprep.subr.mxu0 0.0
    %1361 = vmatpush2.msra.mxu0 0.0
    %1362 = vmatprep.subr.mxu0 0.0
    %1363 = vmatpush2.msra.mxu0 0.0
    %1364 = vmatprep.subr.mxu0 0.0
    %1365 = vmatpush2.msra.mxu0 0.0
    %1366 = vmatprep.subr.mxu0 0.0
    %1367 = vmatpush2.msra.mxu0 0.0
    %1368 = vmatprep.mubr.f32.mxu0 0.0
    %1369 = vmatmul.mubr.f32.gmra.mxu0 %v1299
    %v1370 = vpop.f32.mrf.mxu0
    %v1371 = vadd.f32 0.0, %v1370
    %v1372 = vpop.f32.mrf.mxu0
    %1373 = vmatprep.mubr.f32.mxu0 0.0
    %1374 = vmatmul.mubr.f32.gmra.mxu0 %v1302
    %v1375 = vpop.f32.mrf.mxu0
    %v1376 = vadd.f32 0.0, %v1375
    %v1377 = vpop.f32.mrf.mxu0
    %1378 = vdwg.mxu0
    %v1380 = vsel %vm170, %v1273, 0
    %v1383 = vsel %vm170, %v1274, 0
    %1385 = vmatprep.subr.mxu0 0.0
    %1386 = vmatpush1.msra.mxu0 0.0
    %1387 = vmatprep.subr.mxu0 0.0
    %1388 = vmatpush1.msra.mxu0 0.0
    %1389 = vmatprep.subr.mxu0 0.0
    %1390 = vmatpush1.msra.mxu0 0.0
    %1391 = vmatprep.subr.mxu0 0.0
    %1392 = vmatpush1.msra.mxu0 0.0
    %1393 = vmatprep.subr.mxu0 0.0
    %1394 = vmatpush1.msra.mxu0 0.0
    %1395 = vmatprep.subr.mxu0 0.0
    %1396 = vmatpush1.msra.mxu0 0.0
    %1397 = vmatprep.subr.mxu0 0.0
    %1398 = vmatpush1.msra.mxu0 %v1284
    %1399 = vmatprep.subr.mxu0 0.0
    %1400 = vmatpush1.msra.mxu0 %v1283
    %1401 = vmatprep.subr.mxu0 0.0
    %1402 = vmatpush1.msra.mxu0 %v1282
    %1403 = vmatprep.subr.mxu0 0.0
    %1404 = vmatpush1.msra.mxu0 %v1281
    %1405 = vmatprep.subr.mxu0 0.0
    %1406 = vmatpush1.msra.mxu0 %v1280
    %1407 = vmatprep.subr.mxu0 0.0
    %1408 = vmatpush1.msra.mxu0 %v1279
    %1409 = vmatprep.subr.mxu0 0.0
    %1410 = vmatpush1.msra.mxu0 %v1278
    %1411 = vmatprep.subr.mxu0 0.0
    %1412 = vmatpush1.msra.mxu0 %v1277
    %1413 = vmatprep.subr.mxu0 0.0
    %1414 = vmatpush1.msra.mxu0 %v1276
    %1415 = vmatprep.subr.mxu0 0.0
    %1416 = vmatpush1.msra.mxu0 %v1275
    %1417 = vmatprep.subr.mxu0 0.0
    %1418 = vmatpush2.msra.mxu0 0.0
    %1419 = vmatprep.subr.mxu0 0.0
    %1420 = vmatpush2.msra.mxu0 0.0
    %1421 = vmatprep.subr.mxu0 0.0
    %1422 = vmatpush2.msra.mxu0 0.0
    %1423 = vmatprep.subr.mxu0 0.0
    %1424 = vmatpush2.msra.mxu0 0.0
    %1425 = vmatprep.subr.mxu0 0.0
    %1426 = vmatpush2.msra.mxu0 0.0
    %1427 = vmatprep.subr.mxu0 0.0
    %1428 = vmatpush2.msra.mxu0 0.0
    %1429 = vmatprep.subr.mxu0 0.0
    %1430 = vmatpush2.msra.mxu0 0.0
    %1431 = vmatprep.subr.mxu0 0.0
    %1432 = vmatpush2.msra.mxu0 0.0
    %1433 = vmatprep.subr.mxu0 0.0
    %1434 = vmatpush2.msra.mxu0 0.0
    %1435 = vmatprep.subr.mxu0 0.0
    %1436 = vmatpush2.msra.mxu0 0.0
    %1437 = vmatprep.subr.mxu0 0.0
    %1438 = vmatpush2.msra.mxu0 0.0
    %1439 = vmatprep.subr.mxu0 0.0
    %1440 = vmatpush2.msra.mxu0 0.0
    %1441 = vmatprep.subr.mxu0 0.0
    %1442 = vmatpush2.msra.mxu0 0.0
    %1443 = vmatprep.subr.mxu0 0.0
    %1444 = vmatpush2.msra.mxu0 0.0
    %1445 = vmatprep.subr.mxu0 0.0
    %1446 = vmatpush2.msra.mxu0 0.0
    %1447 = vmatprep.subr.mxu0 0.0
    %1448 = vmatpush2.msra.mxu0 0.0
    %1449 = vmatprep.mubr.f32.mxu0 0.0
    %1450 = vmatmul.mubr.f32.gmra.mxu0 %v1380
    %v1451 = vpop.f32.mrf.mxu0
    %v1452 = vadd.f32 %v1371, %v1451
    %v1453 = vpop.f32.mrf.mxu0
    %1454 = vmatprep.mubr.f32.mxu0 0.0
    %1455 = vmatmul.mubr.f32.gmra.mxu0 %v1383
    %v1456 = vpop.f32.mrf.mxu0
    %v1457 = vadd.f32 %v1376, %v1456
    %v1458 = vpop.f32.mrf.mxu0
    %1459 = vdwg.mxu0
    %v1460 = vld [vmem:[#allocation2 + $0x2] sm:$0xff]
    %v1461 = vld [vmem:[#allocation2 + $0x12] sm:$0xff]
    %s1462 = scalar_lea.vmem %s2, 160
    %v1463 = vld [vmem:[%s1462] sm:$0xff]
    %v1464 = vld [vmem:[%s1462 + $0x8] sm:$0xff]
    %v1465 = vld [vmem:[%s1462 + $0x10] sm:$0xff]
    %v1466 = vld [vmem:[%s1462 + $0x18] sm:$0xff]
    %v1467 = vld [vmem:[%s1462 + $0x20] sm:$0xff]
    %v1468 = vld [vmem:[%s1462 + $0x28] sm:$0xff]
    %v1469 = vld [vmem:[%s1462 + $0x30] sm:$0xff]
    %v1470 = vld [vmem:[%s1462 + $0x38] sm:$0xff]
    %v1471 = vld [vmem:[%s1462 + $0x40] sm:$0xff]
    %v1472 = vld [vmem:[%s1462 + $0x48] sm:$0xff]
    %v1474 = vsel %vm170, %v1460, 0
    %v1477 = vsel %vm170, %v1461, 0
    %1479 = vmatprep.subr.mxu0 0.0
    %1480 = vmatpush1.msra.mxu0 0.0
    %1481 = vmatprep.subr.mxu0 0.0
    %1482 = vmatpush1.msra.mxu0 0.0
    %1483 = vmatprep.subr.mxu0 0.0
    %1484 = vmatpush1.msra.mxu0 0.0
    %1485 = vmatprep.subr.mxu0 0.0
    %1486 = vmatpush1.msra.mxu0 0.0
    %1487 = vmatprep.subr.mxu0 0.0
    %1488 = vmatpush1.msra.mxu0 0.0
    %1489 = vmatprep.subr.mxu0 0.0
    %1490 = vmatpush1.msra.mxu0 0.0
    %1491 = vmatprep.subr.mxu0 0.0
    %1492 = vmatpush1.msra.mxu0 %v1472
    %1493 = vmatprep.subr.mxu0 0.0
    %1494 = vmatpush1.msra.mxu0 %v1471
    %1495 = vmatprep.subr.mxu0 0.0
    %1496 = vmatpush1.msra.mxu0 %v1470
    %1497 = vmatprep.subr.mxu0 0.0
    %1498 = vmatpush1.msra.mxu0 %v1469
    %1499 = vmatprep.subr.mxu0 0.0
    %1500 = vmatpush1.msra.mxu0 %v1468
    %1501 = vmatprep.subr.mxu0 0.0
    %1502 = vmatpush1.msra.mxu0 %v1467
    %1503 = vmatprep.subr.mxu0 0.0
    %1504 = vmatpush1.msra.mxu0 %v1466
    %1505 = vmatprep.subr.mxu0 0.0
    %1506 = vmatpush1.msra.mxu0 %v1465
    %1507 = vmatprep.subr.mxu0 0.0
    %1508 = vmatpush1.msra.mxu0 %v1464
    %1509 = vmatprep.subr.mxu0 0.0
    %1510 = vmatpush1.msra.mxu0 %v1463
    %1511 = vmatprep.subr.mxu0 0.0
    %1512 = vmatpush2.msra.mxu0 0.0
    %1513 = vmatprep.subr.mxu0 0.0
    %1514 = vmatpush2.msra.mxu0 0.0
    %1515 = vmatprep.subr.mxu0 0.0
    %1516 = vmatpush2.msra.mxu0 0.0
    %1517 = vmatprep.subr.mxu0 0.0
    %1518 = vmatpush2.msra.mxu0 0.0
    %1519 = vmatprep.subr.mxu0 0.0
    %1520 = vmatpush2.msra.mxu0 0.0
    %1521 = vmatprep.subr.mxu0 0.0
    %1522 = vmatpush2.msra.mxu0 0.0
    %1523 = vmatprep.subr.mxu0 0.0
    %1524 = vmatpush2.msra.mxu0 0.0
    %1525 = vmatprep.subr.mxu0 0.0
    %1526 = vmatpush2.msra.mxu0 0.0
    %1527 = vmatprep.subr.mxu0 0.0
    %1528 = vmatpush2.msra.mxu0 0.0
    %1529 = vmatprep.subr.mxu0 0.0
    %1530 = vmatpush2.msra.mxu0 0.0
    %1531 = vmatprep.subr.mxu0 0.0
    %1532 = vmatpush2.msra.mxu0 0.0
    %1533 = vmatprep.subr.mxu0 0.0
    %1534 = vmatpush2.msra.mxu0 0.0
    %1535 = vmatprep.subr.mxu0 0.0
    %1536 = vmatpush2.msra.mxu0 0.0
    %1537 = vmatprep.subr.mxu0 0.0
    %1538 = vmatpush2.msra.mxu0 0.0
    %1539 = vmatprep.subr.mxu0 0.0
    %1540 = vmatpush2.msra.mxu0 0.0
    %1541 = vmatprep.subr.mxu0 0.0
    %1542 = vmatpush2.msra.mxu0 0.0
    %1543 = vmatprep.mubr.f32.mxu0 0.0
    %1544 = vmatmul.mubr.f32.gmra.mxu0 %v1474
    %v1545 = vpop.f32.mrf.mxu0
    %v1546 = vadd.f32 0.0, %v1545
    %v1547 = vpop.f32.mrf.mxu0
    %1548 = vmatprep.mubr.f32.mxu0 0.0
    %1549 = vmatmul.mubr.f32.gmra.mxu0 %v1477
    %v1550 = vpop.f32.mrf.mxu0
    %v1551 = vadd.f32 0.0, %v1550
    %v1552 = vpop.f32.mrf.mxu0
    %1553 = vdwg.mxu0
    %v1554 = vadd.f32 %v1452, %v1546
    %v1555 = vadd.f32 %v1457, %v1551
    %v1556 = vld [vmem:[%s5] sm:$0x1]
    %v1557 = vld [vmem:[%s6] sm:$0x1]
    %v1559 = vsel %vm904, %v1554, 0
    %v1562 = vsel %vm904, %v1555, 0
    %1564 = vmatprep.subr.mxu0 0.0
    %1565 = vmatpush1.msra.mxu0 0.0
    %1566 = vmatprep.subr.mxu0 0.0
    %1567 = vmatpush1.msra.mxu0 0.0
    %1568 = vmatprep.subr.mxu0 0.0
    %1569 = vmatpush1.msra.mxu0 0.0
    %1570 = vmatprep.subr.mxu0 0.0
    %1571 = vmatpush1.msra.mxu0 0.0
    %1572 = vmatprep.subr.mxu0 0.0
    %1573 = vmatpush1.msra.mxu0 0.0
    %1574 = vmatprep.subr.mxu0 0.0
    %1575 = vmatpush1.msra.mxu0 0.0
    %1576 = vmatprep.subr.mxu0 0.0
    %1577 = vmatpush1.msra.mxu0 0.0
    %1578 = vmatprep.subr.mxu0 0.0
    %1579 = vmatpush1.msra.mxu0 0.0
    %1580 = vmatprep.subr.mxu0 0.0
    %1581 = vmatpush1.msra.mxu0 %v40
    %1582 = vmatprep.subr.mxu0 0.0
    %1583 = vmatpush1.msra.mxu0 %v39
    %1584 = vmatprep.subr.mxu0 0.0
    %1585 = vmatpush1.msra.mxu0 %v38
    %1586 = vmatprep.subr.mxu0 0.0
    %1587 = vmatpush1.msra.mxu0 %v37
    %1588 = vmatprep.subr.mxu0 0.0
    %1589 = vmatpush1.msra.mxu0 %v36
    %1590 = vmatprep.subr.mxu0 0.0
    %1591 = vmatpush1.msra.mxu0 %v35
    %1592 = vmatprep.subr.mxu0 0.0
    %1593 = vmatpush1.msra.mxu0 %v34
    %1594 = vmatprep.subr.mxu0 0.0
    %1595 = vmatpush1.msra.mxu0 %v33
    %1596 = vmatprep.subr.mxu0 0.0
    %1597 = vmatpush2.msra.mxu0 0.0
    %1598 = vmatprep.subr.mxu0 0.0
    %1599 = vmatpush2.msra.mxu0 0.0
    %1600 = vmatprep.subr.mxu0 0.0
    %1601 = vmatpush2.msra.mxu0 0.0
    %1602 = vmatprep.subr.mxu0 0.0
    %1603 = vmatpush2.msra.mxu0 0.0
    %1604 = vmatprep.subr.mxu0 0.0
    %1605 = vmatpush2.msra.mxu0 0.0
    %1606 = vmatprep.subr.mxu0 0.0
    %1607 = vmatpush2.msra.mxu0 0.0
    %1608 = vmatprep.subr.mxu0 0.0
    %1609 = vmatpush2.msra.mxu0 0.0
    %1610 = vmatprep.subr.mxu0 0.0
    %1611 = vmatpush2.msra.mxu0 0.0
    %1612 = vmatprep.subr.mxu0 0.0
    %1613 = vmatpush2.msra.mxu0 0.0
    %1614 = vmatprep.subr.mxu0 0.0
    %1615 = vmatpush2.msra.mxu0 0.0
    %1616 = vmatprep.subr.mxu0 0.0
    %1617 = vmatpush2.msra.mxu0 0.0
    %1618 = vmatprep.subr.mxu0 0.0
    %1619 = vmatpush2.msra.mxu0 0.0
    %1620 = vmatprep.subr.mxu0 0.0
    %1621 = vmatpush2.msra.mxu0 0.0
    %1622 = vmatprep.subr.mxu0 0.0
    %1623 = vmatpush2.msra.mxu0 0.0
    %1624 = vmatprep.subr.mxu0 0.0
    %1625 = vmatpush2.msra.mxu0 0.0
    %1626 = vmatprep.subr.mxu0 0.0
    %1627 = vmatpush2.msra.mxu0 0.0
    %1628 = vmatprep.mubr.f32.mxu0 0.0
    %1629 = vmatmul.mubr.f32.gmra.mxu0 %v1559
    %v1630 = vpop.f32.mrf.mxu0
    %v1631 = vadd.f32 0.0, %v1630
    %v1632 = vpop.f32.mrf.mxu0
    %1633 = vmatprep.mubr.f32.mxu0 0.0
    %1634 = vmatmul.mubr.f32.gmra.mxu0 %v1562
    %v1635 = vpop.f32.mrf.mxu0
    %v1636 = vadd.f32 0.0, %v1635
    %v1637 = vpop.f32.mrf.mxu0
    %1638 = vdwg.mxu0
    %v1639 = vmul.f32 %v1554, %v1554
    %v1640 = vmul.f32 %v1555, %v1555
    %v1642 = vsel %vm904, %v1639, 0
    %v1645 = vsel %vm904, %v1640, 0
    %1647 = vmatprep.subr.mxu0 0.0
    %1648 = vmatpush1.msra.mxu0 0.0
    %1649 = vmatprep.subr.mxu0 0.0
    %1650 = vmatpush1.msra.mxu0 0.0
    %1651 = vmatprep.subr.mxu0 0.0
    %1652 = vmatpush1.msra.mxu0 0.0
    %1653 = vmatprep.subr.mxu0 0.0
    %1654 = vmatpush1.msra.mxu0 0.0
    %1655 = vmatprep.subr.mxu0 0.0
    %1656 = vmatpush1.msra.mxu0 0.0
    %1657 = vmatprep.subr.mxu0 0.0
    %1658 = vmatpush1.msra.mxu0 0.0
    %1659 = vmatprep.subr.mxu0 0.0
    %1660 = vmatpush1.msra.mxu0 0.0
    %1661 = vmatprep.subr.mxu0 0.0
    %1662 = vmatpush1.msra.mxu0 0.0
    %1663 = vmatprep.subr.mxu0 0.0
    %1664 = vmatpush1.msra.mxu0 %v40
    %1665 = vmatprep.subr.mxu0 0.0
    %1666 = vmatpush1.msra.mxu0 %v39
    %1667 = vmatprep.subr.mxu0 0.0
    %1668 = vmatpush1.msra.mxu0 %v38
    %1669 = vmatprep.subr.mxu0 0.0
    %1670 = vmatpush1.msra.mxu0 %v37
    %1671 = vmatprep.subr.mxu0 0.0
    %1672 = vmatpush1.msra.mxu0 %v36
    %1673 = vmatprep.subr.mxu0 0.0
    %1674 = vmatpush1.msra.mxu0 %v35
    %1675 = vmatprep.subr.mxu0 0.0
    %1676 = vmatpush1.msra.mxu0 %v34
    %1677 = vmatprep.subr.mxu0 0.0
    %1678 = vmatpush1.msra.mxu0 %v33
    %1679 = vmatprep.subr.mxu0 0.0
    %1680 = vmatpush2.msra.mxu0 0.0
    %1681 = vmatprep.subr.mxu0 0.0
    %1682 = vmatpush2.msra.mxu0 0.0
    %1683 = vmatprep.subr.mxu0 0.0
    %1684 = vmatpush2.msra.mxu0 0.0
    %1685 = vmatprep.subr.mxu0 0.0
    %1686 = vmatpush2.msra.mxu0 0.0
    %1687 = vmatprep.subr.mxu0 0.0
    %1688 = vmatpush2.msra.mxu0 0.0
    %1689 = vmatprep.subr.mxu0 0.0
    %1690 = vmatpush2.msra.mxu0 0.0
    %1691 = vmatprep.subr.mxu0 0.0
    %1692 = vmatpush2.msra.mxu0 0.0
    %1693 = vmatprep.subr.mxu0 0.0
    %1694 = vmatpush2.msra.mxu0 0.0
    %1695 = vmatprep.subr.mxu0 0.0
    %1696 = vmatpush2.msra.mxu0 0.0
    %1697 = vmatprep.subr.mxu0 0.0
    %1698 = vmatpush2.msra.mxu0 0.0
    %1699 = vmatprep.subr.mxu0 0.0
    %1700 = vmatpush2.msra.mxu0 0.0
    %1701 = vmatprep.subr.mxu0 0.0
    %1702 = vmatpush2.msra.mxu0 0.0
    %1703 = vmatprep.subr.mxu0 0.0
    %1704 = vmatpush2.msra.mxu0 0.0
    %1705 = vmatprep.subr.mxu0 0.0
    %1706 = vmatpush2.msra.mxu0 0.0
    %1707 = vmatprep.subr.mxu0 0.0
    %1708 = vmatpush2.msra.mxu0 0.0
    %1709 = vmatprep.subr.mxu0 0.0
    %1710 = vmatpush2.msra.mxu0 0.0
    %1711 = vmatprep.mubr.f32.mxu0 0.0
    %1712 = vmatmul.mubr.f32.gmra.mxu0 %v1642
    %v1713 = vpop.f32.mrf.mxu0
    %v1714 = vadd.f32 0.0, %v1713
    %v1715 = vpop.f32.mrf.mxu0
    %1716 = vmatprep.mubr.f32.mxu0 0.0
    %1717 = vmatmul.mubr.f32.gmra.mxu0 %v1645
    %v1718 = vpop.f32.mrf.mxu0
    %v1719 = vadd.f32 0.0, %v1718
    %v1720 = vpop.f32.mrf.mxu0
    %1721 = vdwg.mxu0
    %v1722 = vsel %vm1069, %v1631, 0.0
    %v1723 = vsel %vm1069, %v1636, 0.0
    %v1724 = vadd.f32 %v1722, %v1723
    %v1725 = vrot.slane %v1724, 4
    %v1726 = vadd.f32 %v1724, %v1725
    %v1727 = vrot.slane %v1726, 2
    %v1728 = vadd.f32 %v1726, %v1727
    %v1729 = vrot.slane %v1728, 1
    %v1730 = vadd.f32 %v1728, %v1729
    %v1731 = vmul.f32 %v1730, 0.0078125
    %v1732 = vsel %vm1069, %v1714, 0.0
    %v1733 = vsel %vm1069, %v1719, 0.0
    %v1734 = vadd.f32 %v1732, %v1733
    %v1735 = vrot.slane %v1734, 4
    %v1736 = vadd.f32 %v1734, %v1735
    %v1737 = vrot.slane %v1736, 2
    %v1738 = vadd.f32 %v1736, %v1737
    %v1739 = vrot.slane %v1738, 1
    %v1740 = vadd.f32 %v1738, %v1739
    %v1741 = vmul.f32 %v1740, 0.0078125
    %v1742 = vmul.f32 %v1731, %v1731
    %v1743 = vsub.f32 %v1741, %v1742
    %v1744 = vmax.f32 %v1743, 0.0
    %v1745 = vadd.f32 %v1744, 1e-05
    %v1746 = vrsqrt.pop %v1745
    %v1747 = vmul.f32 %v1556, %v1746
    %v1748 = vmul.f32 %v1731, %v1747
    %v1749 = vsub.f32 %v1557, %v1748
    %v1751 = vsel %vm1069, %v1747, 0
    %1753 = vmatprep.subr.mxu0 0.0
    %1754 = vmatpush1.msra.mxu0 0.0
    %1755 = vmatprep.subr.mxu0 0.0
    %1756 = vmatpush1.msra.mxu0 0.0
    %1757 = vmatprep.subr.mxu0 0.0
    %1758 = vmatpush1.msra.mxu0 0.0
    %1759 = vmatprep.subr.mxu0 0.0
    %1760 = vmatpush1.msra.mxu0 0.0
    %1761 = vmatprep.subr.mxu0 0.0
    %1762 = vmatpush1.msra.mxu0 0.0
    %1763 = vmatprep.subr.mxu0 0.0
    %1764 = vmatpush1.msra.mxu0 0.0
    %1765 = vmatprep.subr.mxu0 0.0
    %1766 = vmatpush1.msra.mxu0 0.0
    %1767 = vmatprep.subr.mxu0 0.0
    %1768 = vmatpush1.msra.mxu0 0.0
    %1769 = vmatprep.subr.mxu0 0.0
    %1770 = vmatpush1.msra.mxu0 0.0
    %1771 = vmatprep.subr.mxu0 0.0
    %1772 = vmatpush1.msra.mxu0 0.0
    %1773 = vmatprep.subr.mxu0 0.0
    %1774 = vmatpush1.msra.mxu0 0.0
    %1775 = vmatprep.subr.mxu0 0.0
    %1776 = vmatpush1.msra.mxu0 0.0
    %1777 = vmatprep.subr.mxu0 0.0
    %1778 = vmatpush1.msra.mxu0 0.0
    %1779 = vmatprep.subr.mxu0 0.0
    %1780 = vmatpush1.msra.mxu0 0.0
    %1781 = vmatprep.subr.mxu0 0.0
    %1782 = vmatpush1.msra.mxu0 0.0
    %1783 = vmatprep.subr.mxu0 0.0
    %1784 = vmatpush1.msra.mxu0 %v41
    %1785 = vmatprep.subr.mxu0 0.0
    %1786 = vmatpush2.msra.mxu0 0.0
    %1787 = vmatprep.subr.mxu0 0.0
    %1788 = vmatpush2.msra.mxu0 0.0
    %1789 = vmatprep.subr.mxu0 0.0
    %1790 = vmatpush2.msra.mxu0 0.0
    %1791 = vmatprep.subr.mxu0 0.0
    %1792 = vmatpush2.msra.mxu0 0.0
    %1793 = vmatprep.subr.mxu0 0.0
    %1794 = vmatpush2.msra.mxu0 0.0
    %1795 = vmatprep.subr.mxu0 0.0
    %1796 = vmatpush2.msra.mxu0 0.0
    %1797 = vmatprep.subr.mxu0 0.0
    %1798 = vmatpush2.msra.mxu0 0.0
    %1799 = vmatprep.subr.mxu0 0.0
    %1800 = vmatpush2.msra.mxu0 0.0
    %1801 = vmatprep.subr.mxu0 0.0
    %1802 = vmatpush2.msra.mxu0 0.0
    %1803 = vmatprep.subr.mxu0 0.0
    %1804 = vmatpush2.msra.mxu0 0.0
    %1805 = vmatprep.subr.mxu0 0.0
    %1806 = vmatpush2.msra.mxu0 0.0
    %1807 = vmatprep.subr.mxu0 0.0
    %1808 = vmatpush2.msra.mxu0 0.0
    %1809 = vmatprep.subr.mxu0 0.0
    %1810 = vmatpush2.msra.mxu0 0.0
    %1811 = vmatprep.subr.mxu0 0.0
    %1812 = vmatpush2.msra.mxu0 0.0
    %1813 = vmatprep.subr.mxu0 0.0
    %1814 = vmatpush2.msra.mxu0 0.0
    %1815 = vmatprep.subr.mxu0 0.0
    %1816 = vmatpush2.msra.mxu0 0.0
    %1817 = vmatprep.mubr.f32.mxu0 0.0
    %1818 = vmatmul.mubr.f32.gmra.mxu0 %v1751
    %v1819 = vpop.f32.mrf.mxu0
    %v1820 = vadd.f32 0.0, %v1819
    %v1821 = vpop.f32.mrf.mxu0
    %1822 = vdwg.mxu0
    %v1824 = vsel %vm1069, %v1749, 0
    %1826 = vmatprep.subr.mxu0 0.0
    %1827 = vmatpush1.msra.mxu0 0.0
    %1828 = vmatprep.subr.mxu0 0.0
    %1829 = vmatpush1.msra.mxu0 0.0
    %1830 = vmatprep.subr.mxu0 0.0
    %1831 = vmatpush1.msra.mxu0 0.0
    %1832 = vmatprep.subr.mxu0 0.0
    %1833 = vmatpush1.msra.mxu0 0.0
    %1834 = vmatprep.subr.mxu0 0.0
    %1835 = vmatpush1.msra.mxu0 0.0
    %1836 = vmatprep.subr.mxu0 0.0
    %1837 = vmatpush1.msra.mxu0 0.0
    %1838 = vmatprep.subr.mxu0 0.0
    %1839 = vmatpush1.msra.mxu0 0.0
    %1840 = vmatprep.subr.mxu0 0.0
    %1841 = vmatpush1.msra.mxu0 0.0
    %1842 = vmatprep.subr.mxu0 0.0
    %1843 = vmatpush1.msra.mxu0 0.0
    %1844 = vmatprep.subr.mxu0 0.0
    %1845 = vmatpush1.msra.mxu0 0.0
    %1846 = vmatprep.subr.mxu0 0.0
    %1847 = vmatpush1.msra.mxu0 0.0
    %1848 = vmatprep.subr.mxu0 0.0
    %1849 = vmatpush1.msra.mxu0 0.0
    %1850 = vmatprep.subr.mxu0 0.0
    %1851 = vmatpush1.msra.mxu0 0.0
    %1852 = vmatprep.subr.mxu0 0.0
    %1853 = vmatpush1.msra.mxu0 0.0
    %1854 = vmatprep.subr.mxu0 0.0
    %1855 = vmatpush1.msra.mxu0 0.0
    %1856 = vmatprep.subr.mxu0 0.0
    %1857 = vmatpush1.msra.mxu0 %v41
    %1858 = vmatprep.subr.mxu0 0.0
    %1859 = vmatpush2.msra.mxu0 0.0
    %1860 = vmatprep.subr.mxu0 0.0
    %1861 = vmatpush2.msra.mxu0 0.0
    %1862 = vmatprep.subr.mxu0 0.0
    %1863 = vmatpush2.msra.mxu0 0.0
    %1864 = vmatprep.subr.mxu0 0.0
    %1865 = vmatpush2.msra.mxu0 0.0
    %1866 = vmatprep.subr.mxu0 0.0
    %1867 = vmatpush2.msra.mxu0 0.0
    %1868 = vmatprep.subr.mxu0 0.0
    %1869 = vmatpush2.msra.mxu0 0.0
    %1870 = vmatprep.subr.mxu0 0.0
    %1871 = vmatpush2.msra.mxu0 0.0
    %1872 = vmatprep.subr.mxu0 0.0
    %1873 = vmatpush2.msra.mxu0 0.0
    %1874 = vmatprep.subr.mxu0 0.0
    %1875 = vmatpush2.msra.mxu0 0.0
    %1876 = vmatprep.subr.mxu0 0.0
    %1877 = vmatpush2.msra.mxu0 0.0
    %1878 = vmatprep.subr.mxu0 0.0
    %1879 = vmatpush2.msra.mxu0 0.0
    %1880 = vmatprep.subr.mxu0 0.0
    %1881 = vmatpush2.msra.mxu0 0.0
    %1882 = vmatprep.subr.mxu0 0.0
    %1883 = vmatpush2.msra.mxu0 0.0
    %1884 = vmatprep.subr.mxu0 0.0
    %1885 = vmatpush2.msra.mxu0 0.0
    %1886 = vmatprep.subr.mxu0 0.0
    %1887 = vmatpush2.msra.mxu0 0.0
    %1888 = vmatprep.subr.mxu0 0.0
    %1889 = vmatpush2.msra.mxu0 0.0
    %1890 = vmatprep.mubr.f32.mxu0 0.0
    %1891 = vmatmul.mubr.f32.gmra.mxu0 %v1824
    %v1892 = vpop.f32.mrf.mxu0
    %v1893 = vadd.f32 0.0, %v1892
    %v1894 = vpop.f32.mrf.mxu0
    %1895 = vdwg.mxu0
    %v1896 = vlaneseq
    %v1897 = vshrl.u32 %v1896, 7
    %v1898 = vsub.s32 0, %v1897
    %v1899 = vrot.slane %v1820, %v1898
    %v1900 = vmul.f32 %v1554, %v1899
    %v1901 = vmul.f32 %v1555, %v1899
    %v1902 = vlaneseq
    %v1903 = vshrl.u32 %v1902, 7
    %v1904 = vsub.s32 0, %v1903
    %v1905 = vrot.slane %v1893, %v1904
    %v1906 = vadd.f32 %v1900, %v1905
    %v1907 = vadd.f32 %v1901, %v1905
    %v1908 = vmax.f32 %v1906, 0.0
    %v1909 = vmax.f32 %v1907, 0.0
    %1910 = vst.msk [vmem:[#allocation3] sm:$0xff] %vm904, %v1908
    %1911 = vst.msk [vmem:[#allocation3 + $0x8] sm:$0xff] %vm904, %v1909
    // Predicated region
    $region38: #{tpu_custom_call.1} parent=1 // pred_check
      _
    $region39: #{tpu_custom_call.1} parent=1 // pred_check_branch
      %1913 = sbr.rel (0) target = $region41
    $region40: #{tpu_custom_call.1} parent=1 // pred_region
      %s1915 = ssub.s32 256, 256
      %1916 = vsyncadd [#allocation4], %s1915
      %s1917 = sshll.u32 [#allocation3], 4
      %s1918 = int_to_ptr.vmem [resolvable:$true] %s1917
      %1923 = dma.vmem_to_hbm [thread:$0]  %s1918, 256, %s9, [#allocation4], 128, 128, 8
    $region41: #{tpu_custom_call.1} parent=1 // pred_fallthru
      _
    // Predicated region
    $region42: #{tpu_custom_call.1} parent=1 // pred_check
      _
    $region43: #{tpu_custom_call.1} parent=1 // pred_check_branch
      %1925 = sbr.rel (0) target = $region45
    $region44: #{tpu_custom_call.1} parent=1 // pred_region
      %1926 = dma.done [#allocation4], 256
    $region45: #{tpu_custom_call.1} parent=1 // pred_fallthru
      _
    %1927 = vsyncpa [#allocation4], 1

</llo_original>
